<compile_context>
chip_gen: v7x
topology: tpu7x:2x2x1
jax: 0.10.0
libtpu: 0.0.40
codegen_flags: <defaults>
</compile_context>

<pallas_src>
import functools

import jax
import jax.numpy as jnp
from jax.experimental import pallas as pl
from jax.experimental.pallas import tpu as pltpu

_SUBLANE = 8    # f32 sublane tile
_LANE = 128     # lane tile


def _round_up(n, m):
    return ((n + m - 1) // m) * m


def _choose_img_tile(B, HW_p, target_lanes=4096):
    """Images packed per grid step: enough lanes to amortize per-step overhead,
    but keep >= 2 grid steps (v7x has 2 TensorCores sharding the grid)."""
    per = max(1, target_lanes // HW_p)
    per = min(per, B)
    per = min(per, max(1, -(-B // 2)))
    return per


def _make_tap_masks(H, W, HW_p, img_tile):
    """(8, img_tile*HW_p) f32 {0,1} validity masks for the 8 non-center taps,
    tiled with period HW_p per image (also kills cross-image leakage)."""
    s = jnp.arange(HW_p, dtype=jnp.int32)
    xx = s % W
    y_cond = {-1: s >= W, 1: s < (H - 1) * W}
    x_cond = {-1: xx >= 1, 1: xx <= W - 2}
    rows = []
    for kh in range(3):
        for kw in range(3):
            if kh == 1 and kw == 1:
                continue
            m = jnp.ones((HW_p,), dtype=bool)
            if kh != 1:
                m = jnp.logical_and(m, y_cond[kh - 1])
            if kw != 1:
                m = jnp.logical_and(m, x_cond[kw - 1])
            rows.append(m)
    masks = jnp.stack(rows, axis=0).astype(jnp.float32)   # (8, HW_p)
    return jnp.tile(masks, (1, img_tile))                 # (8, img_tile*HW_p)


def _conv3x3_relu(x2d, w2d, b2d, masks, W, matmul_dtype):
    """3x3 'same' conv + bias + ReLU on channels-major, lane-flat images.

    x2d   : (Cin_p, N) f32, N = IMG_TILE*HW_p, flat pixel index on lanes
    w2d   : (Cout_p, 9*Cin_p) matmul_dtype, tap-major / channel-minor
    b2d   : (Cout_p, 1) f32
    masks : (8, N) f32 {0,1} validity masks for the 8 shifted taps
    """
    n = x2d.shape[-1]
    taps = []
    for kh in range(3):
        for kw in range(3):
            d = (kh - 1) * W + (kw - 1)        # flat-index offset of this tap
            # result[:, s] = x2d[:, (s + d) % n]; single XLU rotate, wrap-around
            # and out-of-image reads are zeroed by the mask below.
            t = x2d if d == 0 else pltpu.roll(x2d, shift=(-d) % n, axis=1)
            ti = kh * 3 + kw
            if ti != 4:                        # center tap needs no mask
                r = ti if ti < 4 else ti - 1
                t = t * masks[r:r + 1, :]      # implicit 'same' zero padding (f32 VPU)
            taps.append(t)
    # im2col (9*Cin_p, N): one big-K MXU contraction per layer.  Concat in f32
    # (8-row sublane aligned), then a single cast to the matmul operand dtype.
    # TODO(synk): for large channel counts split into 3 accumulating matmuls
    # grouped by kh (K = 3*Cin_p each) to cut the peak live im2col ~3x (v7x VMEM).
    a = jnp.concatenate(taps, axis=0).astype(matmul_dtype)
    out = jnp.dot(w2d, a, preferred_element_type=jnp.float32)   # f32 accumulate
    return jnp.maximum(out + b2d, 0.0)


def _conv_block_kernel(x_ref, m_ref, w1_ref, b1_ref, w2_ref, b2_ref, o_ref, *,
                       W, matmul_dtype):
    """Fused relu(conv2(relu(conv1(x)))) for IMG_TILE images, all on-chip."""
    x = x_ref[...]                             # (Cin_p, N) f32
    masks = m_ref[...]                         # (8, N)  f32, grid-invariant
    h = _conv3x3_relu(x, w1_ref[...], b1_ref[...], masks, W, matmul_dtype)
    y = _conv3x3_relu(h, w2_ref[...], b2_ref[...], masks, W, matmul_dtype)
    o_ref[...] = y.astype(o_ref.dtype)


def _pack_weights(w, cin_p, cout_p, dtype):
    """(Cout, Cin, 3, 3) PyTorch layout -> (Cout_p, 9*Cin_p), tap-major/channel-minor."""
    cout, cin, kh, kw = w.shape
    wt = jnp.transpose(w, (0, 2, 3, 1))        # (Cout, KH, KW, Cin)
    wt = jnp.pad(wt, ((0, cout_p - cout), (0, 0), (0, 0), (0, cin_p - cin)))
    return wt.reshape(cout_p, kh * kw * cin_p).astype(dtype)


def _pack_bias(b, cout_p):
    return jnp.pad(b, (0, cout_p - b.shape[0])).reshape(cout_p, 1).astype(jnp.float32)


def conv_block_forward(x_nchw, params, *, img_tile=None, matmul_dtype=jnp.bfloat16):
    """Matches ConvBlock.forward: relu(conv2(relu(conv1(x)))), NCHW in/out."""
    w1, b1, w2, b2 = params                    # w: (Cout, Cin, 3, 3), b: (Cout,)
    B, Cin, H, W = x_nchw.shape
    Cout = w1.shape[0]
    HW = H * W
    HW_p = _round_up(HW, _LANE)                # lane-dense stores
    Cin_p = _round_up(Cin, _SUBLANE)
    Cout_p = _round_up(Cout, _SUBLANE)

    if img_tile is None:
        img_tile = _choose_img_tile(B, HW_p)
    B_p = _round_up(B, img_tile)
    n_steps = B_p // img_tile
    lanes = img_tile * HW_p

    # Layout glue (plain XLA, tiny tensors): channels-major with images and
    # pixels packed on the lane axis, padded so every kernel tile is aligned.
    x = jnp.transpose(x_nchw.reshape(B, Cin, HW), (1, 0, 2))          # (Cin, B, HW)
    x = jnp.pad(x, ((0, Cin_p - Cin), (0, B_p - B), (0, HW_p - HW)))
    x2d = x.reshape(Cin_p, B_p * HW_p).astype(jnp.float32)

    masks = _make_tap_masks(H, W, HW_p, img_tile)                     # (8, lanes) f32
    w1_2d = _pack_weights(w1, Cin_p, Cout_p, matmul_dtype)            # (Cout_p, 9*Cin_p)
    w2_2d = _pack_weights(w2, Cout_p, Cout_p, matmul_dtype)           # (Cout_p, 9*Cout_p)
    b1_2d = _pack_bias(b1, Cout_p)
    b2_2d = _pack_bias(b2, Cout_p)

    kernel = functools.partial(_conv_block_kernel, W=W, matmul_dtype=matmul_dtype)

    # Rough per-step VMEM budget: double-buffered blocks + live im2col/intermediate.
    msize = jnp.dtype(matmul_dtype).itemsize
    vmem_bytes = (
        2 * Cin_p * lanes * 4 + 2 * Cout_p * lanes * 4     # x / out blocks (x2 buffers)
        + 8 * lanes * 4                                    # tap masks
        + 2 * 9 * (Cin_p + Cout_p) * Cout_p * msize        # weights (x2 buffers)
        + 9 * (Cin_p + Cout_p) * lanes * msize             # live im2col (both layers)
        + 2 * Cout_p * lanes * 4                           # intermediate h + accumulator
    )
    cp_kwargs = dict(dimension_semantics=("parallel",))
    if vmem_bytes > 12 * (1 << 20):      # beyond v5e's 16 MiB scoped-VMEM default
        cp_kwargs["vmem_limit_bytes"] = int(min(vmem_bytes * 2, 64 * (1 << 20)))

    # TODO(synk): for large H*W add a spatial row-tile grid axis with a 1-row
    # halo (and pl.Buffered(1) on the grid-invariant weight specs) so the 9x
    # im2col fits v7x's 64 MiB VMEM; unnecessary at these shapes.
    out = pl.pallas_call(
        kernel,
        out_shape=jax.ShapeDtypeStruct((Cout_p, B_p * HW_p), jnp.float32),
        grid_spec=pltpu.PrefetchScalarGridSpec(
            num_scalar_prefetch=0,
            grid=(n_steps,),                   # IMG_TILE images per step
            in_specs=[
                pl.BlockSpec((Cin_p, lanes), lambda i: (0, i)),
                pl.BlockSpec((8, lanes), lambda i: (0, 0)),          # masks (invariant)
                pl.BlockSpec((Cout_p, 9 * Cin_p), lambda i: (0, 0)),
                pl.BlockSpec((Cout_p, 1), lambda i: (0, 0)),
                pl.BlockSpec((Cout_p, 9 * Cout_p), lambda i: (0, 0)),
                pl.BlockSpec((Cout_p, 1), lambda i: (0, 0)),
            ],
            out_specs=pl.BlockSpec((Cout_p, lanes), lambda i: (0, i)),
        ),
        compiler_params=pltpu.CompilerParams(**cp_kwargs),
    )(x2d, masks, w1_2d, b1_2d, w2_2d, b2_2d)

    out = out.reshape(Cout_p, B_p, HW_p)[:Cout, :B, :HW]
    return jnp.transpose(out, (1, 0, 2)).reshape(B, Cout, H, W).astype(x_nchw.dtype)


def init_params(key, in_channels, out_channels, kernel_size=3):
    """Deterministic init (kaiming-uniform-like bounds, PyTorch Conv2d weight layout)."""
    k1, k2, k3, k4 = jax.random.split(key, 4)
    fan_in1 = in_channels * kernel_size * kernel_size
    fan_in2 = out_channels * kernel_size * kernel_size
    bnd1 = 1.0 / jnp.sqrt(fan_in1)
    bnd2 = 1.0 / jnp.sqrt(fan_in2)
    w1 = jax.random.uniform(k1, (out_channels, in_channels, kernel_size, kernel_size),
                            jnp.float32, -bnd1, bnd1)
    b1 = jax.random.uniform(k2, (out_channels,), jnp.float32, -bnd1, bnd1)
    w2 = jax.random.uniform(k3, (out_channels, out_channels, kernel_size, kernel_size),
                            jnp.float32, -bnd2, bnd2)
    b2 = jax.random.uniform(k4, (out_channels,), jnp.float32, -bnd2, bnd2)
    return (w1, b1, w2, b2)


if __name__ == "__main__":
    key = jax.random.PRNGKey(0)
    kx, kp = jax.random.split(key)

    B, Cin, Cout, H, W = 8, 4, 8, 16, 16
    x = jax.random.normal(kx, (B, Cin, H, W), jnp.float32)   # NCHW, like PyTorch
    params = init_params(kp, Cin, Cout)

    y = conv_block_forward(x, params)
    jax.block_until_ready(y)

    assert y.shape == (B, Cout, H, W), y.shape
    assert bool(jnp.all(y >= 0.0))                           # ReLU output

    # Reference convolutions (NCHW / OIHW, 'SAME'), with selectable operand dtype.
    def ref_forward(x_nchw, ps, op_dtype):
        w1, b1, w2, b2 = ps

        def conv(xc, w, b):
            o = jax.lax.conv_general_dilated(
                xc.astype(op_dtype), w.astype(op_dtype), window_strides=(1, 1),
                padding="SAME", dimension_numbers=("NCHW", "OIHW", "NCHW"),
                preferred_element_type=jnp.float32)
            return jax.nn.relu(o + b.reshape(1, -1, 1, 1))

        return conv(conv(x_nchw, w1, b1), w2, b2)

    # Tight check against a reference using the same bf16 operand quantization.
    y_ref_bf16 = ref_forward(x, params, jnp.bfloat16)
    err = float(jnp.max(jnp.abs(y - y_ref_bf16)))
    assert err < 1e-2, err

    # Sanity check against the exact f32 convolution (bf16 operand rounding bound).
    y_ref_f32 = ref_forward(x, params, jnp.float32)
    err32 = float(jnp.max(jnp.abs(y - y_ref_f32)))
    assert err32 < 1e-1, err32

    print("KERNEL_OK")
</pallas_src>

<mosaic_0001>
module attributes {stable_mosaic.version = 11 : i64} {
  func.func @_conv_block_kernel(%arg0: i32, %arg1: memref<8x1024xf32, #tpu.memory_space<vmem>>, %arg2: memref<8x1024xf32, #tpu.memory_space<vmem>>, %arg3: memref<8x72xbf16, #tpu.memory_space<vmem>>, %arg4: memref<8x1xf32, #tpu.memory_space<vmem>>, %arg5: memref<8x72xbf16, #tpu.memory_space<vmem>>, %arg6: memref<8x1xf32, #tpu.memory_space<vmem>>, %arg7: memref<8x1024xf32, #tpu.memory_space<vmem>>) attributes {dimension_semantics = [#tpu.dimension_semantics<parallel>], iteration_bounds = array<i64: 2>, scalar_prefetch = 0 : i64, scratch_operands = 0 : i64, tpu.core_type = #tpu.core_type<tc>, window_params = [{transform_indices = @transform_0, window_bounds = array<i64: 8, 1024>}, {pipeline_mode = #tpu.pipeline_mode<synchronous>, transform_indices = @transform_1, window_bounds = array<i64: 8, 1024>}, {pipeline_mode = #tpu.pipeline_mode<synchronous>, transform_indices = @transform_2, window_bounds = array<i64: 8, 72>}, {pipeline_mode = #tpu.pipeline_mode<synchronous>, transform_indices = @transform_3, window_bounds = array<i64: 8, 1>}, {pipeline_mode = #tpu.pipeline_mode<synchronous>, transform_indices = @transform_4, window_bounds = array<i64: 8, 72>}, {pipeline_mode = #tpu.pipeline_mode<synchronous>, transform_indices = @transform_5, window_bounds = array<i64: 8, 1>}, {transform_indices = @transform_6, window_bounds = array<i64: 8, 1024>}]} {
    %c0 = arith.constant 0 : index
    %c0_0 = arith.constant 0 : index
    %0 = vector.load %arg1[%c0, %c0_0] : memref<8x1024xf32, #tpu.memory_space<vmem>>, vector<8x1024xf32>
    %c0_1 = arith.constant 0 : index
    %c0_2 = arith.constant 0 : index
    %1 = vector.load %arg2[%c0_1, %c0_2] : memref<8x1024xf32, #tpu.memory_space<vmem>>, vector<8x1024xf32>
    %c0_3 = arith.constant 0 : index
    %c0_4 = arith.constant 0 : index
    %2 = vector.load %arg3[%c0_3, %c0_4] : memref<8x72xbf16, #tpu.memory_space<vmem>>, vector<8x72xbf16>
    %c0_5 = arith.constant 0 : index
    %c0_6 = arith.constant 0 : index
    %3 = vector.load %arg4[%c0_5, %c0_6] : memref<8x1xf32, #tpu.memory_space<vmem>>, vector<8x1xf32>
    %c17_i32 = arith.constant 17 : i32
    %4 = tpu.dynamic_rotate %0 by %c17_i32 dim 1 : vector<8x1024xf32>, i32 -> vector<8x1024xf32>
    %5 = vector.extract_strided_slice %1 {offsets = [0, 0], sizes = [1, 1024], strides = [1, 1]} : vector<8x1024xf32> to vector<1x1024xf32>
    %6 = vector.broadcast %5 : vector<1x1024xf32> to vector<8x1024xf32>
    %7 = arith.mulf %4, %6 : vector<8x1024xf32>
    %c16_i32 = arith.constant 16 : i32
    %8 = tpu.dynamic_rotate %0 by %c16_i32 dim 1 : vector<8x1024xf32>, i32 -> vector<8x1024xf32>
    %9 = vector.extract_strided_slice %1 {offsets = [1, 0], sizes = [1, 1024], strides = [1, 1]} : vector<8x1024xf32> to vector<1x1024xf32>
    %10 = vector.broadcast %9 : vector<1x1024xf32> to vector<8x1024xf32>
    %11 = arith.mulf %8, %10 : vector<8x1024xf32>
    %c15_i32 = arith.constant 15 : i32
    %12 = tpu.dynamic_rotate %0 by %c15_i32 dim 1 : vector<8x1024xf32>, i32 -> vector<8x1024xf32>
    %13 = vector.extract_strided_slice %1 {offsets = [2, 0], sizes = [1, 1024], strides = [1, 1]} : vector<8x1024xf32> to vector<1x1024xf32>
    %14 = vector.broadcast %13 : vector<1x1024xf32> to vector<8x1024xf32>
    %15 = arith.mulf %12, %14 : vector<8x1024xf32>
    %c1_i32 = arith.constant 1 : i32
    %16 = tpu.dynamic_rotate %0 by %c1_i32 dim 1 : vector<8x1024xf32>, i32 -> vector<8x1024xf32>
    %17 = vector.extract_strided_slice %1 {offsets = [3, 0], sizes = [1, 1024], strides = [1, 1]} : vector<8x1024xf32> to vector<1x1024xf32>
    %18 = vector.broadcast %17 : vector<1x1024xf32> to vector<8x1024xf32>
    %19 = arith.mulf %16, %18 : vector<8x1024xf32>
    %c1023_i32 = arith.constant 1023 : i32
    %20 = tpu.dynamic_rotate %0 by %c1023_i32 dim 1 : vector<8x1024xf32>, i32 -> vector<8x1024xf32>
    %21 = vector.extract_strided_slice %1 {offsets = [4, 0], sizes = [1, 1024], strides = [1, 1]} : vector<8x1024xf32> to vector<1x1024xf32>
    %22 = vector.broadcast %21 : vector<1x1024xf32> to vector<8x1024xf32>
    %23 = arith.mulf %20, %22 : vector<8x1024xf32>
    %c1009_i32 = arith.constant 1009 : i32
    %24 = tpu.dynamic_rotate %0 by %c1009_i32 dim 1 : vector<8x1024xf32>, i32 -> vector<8x1024xf32>
    %25 = vector.extract_strided_slice %1 {offsets = [5, 0], sizes = [1, 1024], strides = [1, 1]} : vector<8x1024xf32> to vector<1x1024xf32>
    %26 = vector.broadcast %25 : vector<1x1024xf32> to vector<8x1024xf32>
    %27 = arith.mulf %24, %26 : vector<8x1024xf32>
    %c1008_i32 = arith.constant 1008 : i32
    %28 = tpu.dynamic_rotate %0 by %c1008_i32 dim 1 : vector<8x1024xf32>, i32 -> vector<8x1024xf32>
    %29 = vector.extract_strided_slice %1 {offsets = [6, 0], sizes = [1, 1024], strides = [1, 1]} : vector<8x1024xf32> to vector<1x1024xf32>
    %30 = vector.broadcast %29 : vector<1x1024xf32> to vector<8x1024xf32>
    %31 = arith.mulf %28, %30 : vector<8x1024xf32>
    %c1007_i32 = arith.constant 1007 : i32
    %32 = tpu.dynamic_rotate %0 by %c1007_i32 dim 1 : vector<8x1024xf32>, i32 -> vector<8x1024xf32>
    %33 = vector.extract_strided_slice %1 {offsets = [7, 0], sizes = [1, 1024], strides = [1, 1]} : vector<8x1024xf32> to vector<1x1024xf32>
    %34 = vector.broadcast %33 : vector<1x1024xf32> to vector<8x1024xf32>
    %35 = arith.mulf %32, %34 : vector<8x1024xf32>
    %36 = tpu.concatenate %7, %11, %15, %19, %0, %23, %27, %31, %35 in 0 : vector<8x1024xf32>, vector<8x1024xf32>, vector<8x1024xf32>, vector<8x1024xf32>, vector<8x1024xf32>, vector<8x1024xf32>, vector<8x1024xf32>, vector<8x1024xf32>, vector<8x1024xf32> -> vector<72x1024xf32>
    %37 = arith.truncf %36 : vector<72x1024xf32> to vector<72x1024xbf16>
    %cst = arith.constant dense<0.000000e+00> : vector<8x1024xf32>
    %38 = tpu.matmul %2, %37, %cst {dimension_numbers = #tpu.dot_dimension_numbers<[1], [0], [0], [1], [0, 0, 1, 1], [], []>} : vector<8x72xbf16>, vector<72x1024xbf16>, vector<8x1024xf32> -> vector<8x1024xf32>
    %39 = vector.broadcast %3 : vector<8x1xf32> to vector<8x1024xf32>
    %40 = arith.addf %38, %39 : vector<8x1024xf32>
    %cst_7 = arith.constant 0.000000e+00 : f32
    %41 = vector.broadcast %cst_7 : f32 to vector<8x1024xf32>
    %42 = arith.maximumf %40, %41 : vector<8x1024xf32>
    %c0_8 = arith.constant 0 : index
    %c0_9 = arith.constant 0 : index
    %43 = vector.load %arg5[%c0_8, %c0_9] : memref<8x72xbf16, #tpu.memory_space<vmem>>, vector<8x72xbf16>
    %c0_10 = arith.constant 0 : index
    %c0_11 = arith.constant 0 : index
    %44 = vector.load %arg6[%c0_10, %c0_11] : memref<8x1xf32, #tpu.memory_space<vmem>>, vector<8x1xf32>
    %c17_i32_12 = arith.constant 17 : i32
    %45 = tpu.dynamic_rotate %42 by %c17_i32_12 dim 1 : vector<8x1024xf32>, i32 -> vector<8x1024xf32>
    %46 = vector.extract_strided_slice %1 {offsets = [0, 0], sizes = [1, 1024], strides = [1, 1]} : vector<8x1024xf32> to vector<1x1024xf32>
    %47 = vector.broadcast %46 : vector<1x1024xf32> to vector<8x1024xf32>
    %48 = arith.mulf %45, %47 : vector<8x1024xf32>
    %c16_i32_13 = arith.constant 16 : i32
    %49 = tpu.dynamic_rotate %42 by %c16_i32_13 dim 1 : vector<8x1024xf32>, i32 -> vector<8x1024xf32>
    %50 = vector.extract_strided_slice %1 {offsets = [1, 0], sizes = [1, 1024], strides = [1, 1]} : vector<8x1024xf32> to vector<1x1024xf32>
    %51 = vector.broadcast %50 : vector<1x1024xf32> to vector<8x1024xf32>
    %52 = arith.mulf %49, %51 : vector<8x1024xf32>
    %c15_i32_14 = arith.constant 15 : i32
    %53 = tpu.dynamic_rotate %42 by %c15_i32_14 dim 1 : vector<8x1024xf32>, i32 -> vector<8x1024xf32>
    %54 = vector.extract_strided_slice %1 {offsets = [2, 0], sizes = [1, 1024], strides = [1, 1]} : vector<8x1024xf32> to vector<1x1024xf32>
    %55 = vector.broadcast %54 : vector<1x1024xf32> to vector<8x1024xf32>
    %56 = arith.mulf %53, %55 : vector<8x1024xf32>
    %c1_i32_15 = arith.constant 1 : i32
    %57 = tpu.dynamic_rotate %42 by %c1_i32_15 dim 1 : vector<8x1024xf32>, i32 -> vector<8x1024xf32>
    %58 = vector.extract_strided_slice %1 {offsets = [3, 0], sizes = [1, 1024], strides = [1, 1]} : vector<8x1024xf32> to vector<1x1024xf32>
    %59 = vector.broadcast %58 : vector<1x1024xf32> to vector<8x1024xf32>
    %60 = arith.mulf %57, %59 : vector<8x1024xf32>
    %c1023_i32_16 = arith.constant 1023 : i32
    %61 = tpu.dynamic_rotate %42 by %c1023_i32_16 dim 1 : vector<8x1024xf32>, i32 -> vector<8x1024xf32>
    %62 = vector.extract_strided_slice %1 {offsets = [4, 0], sizes = [1, 1024], strides = [1, 1]} : vector<8x1024xf32> to vector<1x1024xf32>
    %63 = vector.broadcast %62 : vector<1x1024xf32> to vector<8x1024xf32>
    %64 = arith.mulf %61, %63 : vector<8x1024xf32>
    %c1009_i32_17 = arith.constant 1009 : i32
    %65 = tpu.dynamic_rotate %42 by %c1009_i32_17 dim 1 : vector<8x1024xf32>, i32 -> vector<8x1024xf32>
    %66 = vector.extract_strided_slice %1 {offsets = [5, 0], sizes = [1, 1024], strides = [1, 1]} : vector<8x1024xf32> to vector<1x1024xf32>
    %67 = vector.broadcast %66 : vector<1x1024xf32> to vector<8x1024xf32>
    %68 = arith.mulf %65, %67 : vector<8x1024xf32>
    %c1008_i32_18 = arith.constant 1008 : i32
    %69 = tpu.dynamic_rotate %42 by %c1008_i32_18 dim 1 : vector<8x1024xf32>, i32 -> vector<8x1024xf32>
    %70 = vector.extract_strided_slice %1 {offsets = [6, 0], sizes = [1, 1024], strides = [1, 1]} : vector<8x1024xf32> to vector<1x1024xf32>
    %71 = vector.broadcast %70 : vector<1x1024xf32> to vector<8x1024xf32>
    %72 = arith.mulf %69, %71 : vector<8x1024xf32>
    %c1007_i32_19 = arith.constant 1007 : i32
    %73 = tpu.dynamic_rotate %42 by %c1007_i32_19 dim 1 : vector<8x1024xf32>, i32 -> vector<8x1024xf32>
    %74 = vector.extract_strided_slice %1 {offsets = [7, 0], sizes = [1, 1024], strides = [1, 1]} : vector<8x1024xf32> to vector<1x1024xf32>
    %75 = vector.broadcast %74 : vector<1x1024xf32> to vector<8x1024xf32>
    %76 = arith.mulf %73, %75 : vector<8x1024xf32>
    %77 = tpu.concatenate %48, %52, %56, %60, %42, %64, %68, %72, %76 in 0 : vector<8x1024xf32>, vector<8x1024xf32>, vector<8x1024xf32>, vector<8x1024xf32>, vector<8x1024xf32>, vector<8x1024xf32>, vector<8x1024xf32>, vector<8x1024xf32>, vector<8x1024xf32> -> vector<72x1024xf32>
    %78 = arith.truncf %77 : vector<72x1024xf32> to vector<72x1024xbf16>
    %cst_20 = arith.constant dense<0.000000e+00> : vector<8x1024xf32>
    %79 = tpu.matmul %43, %78, %cst_20 {dimension_numbers = #tpu.dot_dimension_numbers<[1], [0], [0], [1], [0, 0, 1, 1], [], []>} : vector<8x72xbf16>, vector<72x1024xbf16>, vector<8x1024xf32> -> vector<8x1024xf32>
    %80 = vector.broadcast %44 : vector<8x1xf32> to vector<8x1024xf32>
    %81 = arith.addf %79, %80 : vector<8x1024xf32>
    %cst_21 = arith.constant 0.000000e+00 : f32
    %82 = vector.broadcast %cst_21 : f32 to vector<8x1024xf32>
    %83 = arith.maximumf %81, %82 : vector<8x1024xf32>
    %c0_22 = arith.constant 0 : index
    %c0_23 = arith.constant 0 : index
    %84 = vector.load %arg7[%c0_22, %c0_23] : memref<8x1024xf32, #tpu.memory_space<vmem>>, vector<8x1024xf32>
    tpu.vector_store %arg7[%c0_22, %c0_23], %83 {strides = array<i32>} : memref<8x1024xf32, #tpu.memory_space<vmem>>, vector<8x1024xf32>,
    return
  }
  func.func @transform_0(%arg0: i32) -> (i32, i32) {
    %c0_i32 = arith.constant 0 : i32
    %c0_i32_0 = arith.constant 0 : i32
    return %c0_i32, %arg0 : i32, i32
  }
  func.func @transform_1(%arg0: i32) -> (i32, i32) {
    %c0_i32 = arith.constant 0 : i32
    %c0_i32_0 = arith.constant 0 : i32
    %c0_i32_1 = arith.constant 0 : i32
    return %c0_i32, %c0_i32_0 : i32, i32
  }
  func.func @transform_2(%arg0: i32) -> (i32, i32) {
    %c0_i32 = arith.constant 0 : i32
    %c0_i32_0 = arith.constant 0 : i32
    %c0_i32_1 = arith.constant 0 : i32
    return %c0_i32, %c0_i32_0 : i32, i32
  }
  func.func @transform_3(%arg0: i32) -> (i32, i32) {
    %c0_i32 = arith.constant 0 : i32
    %c0_i32_0 = arith.constant 0 : i32
    %c0_i32_1 = arith.constant 0 : i32
    return %c0_i32, %c0_i32_0 : i32, i32
  }
  func.func @transform_4(%arg0: i32) -> (i32, i32) {
    %c0_i32 = arith.constant 0 : i32
    %c0_i32_0 = arith.constant 0 : i32
    %c0_i32_1 = arith.constant 0 : i32
    return %c0_i32, %c0_i32_0 : i32, i32
  }
  func.func @transform_5(%arg0: i32) -> (i32, i32) {
    %c0_i32 = arith.constant 0 : i32
    %c0_i32_0 = arith.constant 0 : i32
    %c0_i32_1 = arith.constant 0 : i32
    return %c0_i32, %c0_i32_0 : i32, i32
  }
  func.func @transform_6(%arg0: i32) -> (i32, i32) {
    %c0_i32 = arith.constant 0 : i32
    %c0_i32_0 = arith.constant 0 : i32
    return %c0_i32, %arg0 : i32, i32
  }
}

</mosaic_0001>

<llo_original>
// kernel: tpu_custom_call.1
$region0: #{tpu_custom_call.1}
  #allocation0 [shape = 'u32[]', space=smem, size = 0x4, offset = 0x4, fixed_abs, tag = 'smem constant byte address 0x4 - core index']
  #allocation1 [shape = 'u32[144,128]{1,0:T(1,128)}', space=vmem, size = 0x12000, scoped, tag = 'internal scratch']
  %s0 = inlined_call_operand.hbm [shape: f32[8,2048], index: 0, kind: input, shape index: {}]
  %s1 = inlined_call_operand.hbm [shape: f32[8,1024], index: 1, kind: input, shape index: {}]
  %s2 = inlined_call_operand.vmem [shape: bf16[8,72], index: 2, kind: input, shape index: {}]
  %s3 = inlined_call_operand.vmem [shape: f32[8,1], index: 3, kind: input, shape index: {}]
  %s4 = inlined_call_operand.vmem [shape: bf16[8,72], index: 4, kind: input, shape index: {}]
  %s5 = inlined_call_operand.vmem [shape: f32[8,1], index: 5, kind: input, shape index: {}]
  %s6 = inlined_call_operand.hbm [shape: f32[8,2048], index: 6, kind: output, shape index: {}]
  %s7 = sld [smem:[#allocation0]]
  $region65: #{tpu_custom_call.1} parent=0
    _
  %s9 = ssub.s32 1, %s7
  %s10 = scalar_select 0, %s9, %s7
  $region1: #{tpu_custom_call.1} parent=0
    #allocation2 [shape = 'u8[65536]{0}', space=vmem, size = 0x10000, scoped, tag = 'input window, operand 0']
    #allocation3 [shape = 's32[2]{0}', space=sflag, size = 0x8, scoped, tag = 'scoped memory for tpu_custom_call.1']
    #allocation4 [shape = 's32[2]{0}', space=sflag, size = 0x8, scoped, tag = 'scoped memory for tpu_custom_call.1']
    #allocation5 [shape = 'u8[32768]{0}', space=vmem, size = 0x8000, scoped, tag = 'input window, operand 1, single buffered']
    #allocation6 [shape = 's32[1]{0}', space=sflag, size = 0x4, scoped, tag = 'scoped memory for tpu_custom_call.1']
    #allocation7 [shape = 'u8[65536]{0}', space=vmem, size = 0x10000, scoped, tag = 'output window, operand 0']
    %11 = vsyncpa [#allocation3], 0
    %s12 = scalar_lea.sflag [#allocation3], 1
    %13 = vsyncpa %s12, 0
    %14 = vsyncpa [#allocation6], 0
    %15 = vsyncpa [#allocation4], 0
    %s16 = scalar_lea.sflag [#allocation4], 1
    %17 = vsyncpa %s16, 0
    loop: start=0, step=1, limit=4
    $region2: #{tpu_custom_call.1} parent=1 // loop_pre_header
      _
    $region3: #{tpu_custom_call.1} parent=1 // loop_header
      %s19 = sphi 0, %s23
      %p20 = scmp.ge.s32.totalorder %s19, 4
      %s29 = sphi 0, %s31
      %s32 = sphi 0, %s29
      %s33 = sphi 0, %s32
      %s49 = sphi 0, %s33
      %s53 = sphi 0, %s53
      %s55 = sphi 0, %s53
      %s56 = sphi 0, %s55
      %s70 = sphi 0, %s56
      %s74 = sphi 0, %s74
      %s76 = sphi 0, %s74
      %s77 = sphi 0, %s76
      %s91 = sphi 0, %s77
      %s95 = sphi 0, %s95
      %s97 = sphi 0, %s95
      %s98 = sphi 0, %s97
      %s112 = sphi 0, %s98
      %s116 = sphi 0, %s116
      %s118 = sphi 0, %s116
      %s119 = sphi 0, %s118
      %s133 = sphi 0, %s119
      %s137 = sphi 0, %s137
      %s139 = sphi 0, %s137
      %s140 = sphi 0, %s139
      %s154 = sphi 0, %s140
      %s160 = sphi 0, %s162
      %s163 = sphi 0, %s160
      %s164 = sphi 0, %s163
      %s180 = sphi 0, %s164
    $region4: #{tpu_custom_call.1} parent=1 // loop_header_branch
      %22 = sbr.rel (%p20) target = $region8
    $region5: #{tpu_custom_call.1} parent=1 // loop_body
      %s24 = ssub.s32 %s19, 1
      %s25 = ssub.s32 %s19, 2
      %s26 = sadd.s32 %s19, 1
      %s27 = ssub.s32 %s19, %s26
      %p28 = scmp.eq.s32.totalorder %s27, 0
      %s30 = sadd.s32 %s29, 1
      %s31 = scalar_select %p28, %s29, %s30
      %p34 = pneg %p28
      %p35 = scmp.eq.s32.totalorder %s19, 1
      %p36 = por %p34, %p35
      %p37 = scmp.ne.s32.totalorder %s29, %s32
      %p38 = scmp.eq.s32.totalorder %s19, 0
      %p39 = por %p37, %p38
      %p40 = scmp.ne.s32.totalorder %s29, %s32
      %p41 = scmp.eq.s32.totalorder %s24, 1
      %p42 = por %p40, %p41
      %p43 = scmp.ne.s32.totalorder %s32, %s33
      %p44 = scmp.eq.s32.totalorder %s24, 0
      %p45 = por %p43, %p44
      %p46 = scmp.ne.s32.totalorder %s32, %s33
      %p47 = scmp.eq.s32.totalorder %s25, 1
      %p48 = por %p46, %p47
      %p50 = scmp.ne.s32.totalorder %s33, %s49
      %p51 = scmp.eq.s32.totalorder %s25, 0
      %p52 = por %p50, %p51
      %s54 = sadd.s32 %s53, 1
      %p57 = scmp.eq.s32.totalorder %s19, 1
      %p58 = scmp.ne.s32.totalorder %s53, %s55
      %p59 = scmp.eq.s32.totalorder %s19, 0
      %p60 = por %p58, %p59
      %p61 = scmp.ne.s32.totalorder %s53, %s55
      %p62 = scmp.eq.s32.totalorder %s24, 1
      %p63 = por %p61, %p62
      %p64 = scmp.ne.s32.totalorder %s55, %s56
      %p65 = scmp.eq.s32.totalorder %s24, 0
      %p66 = por %p64, %p65
      %p67 = scmp.ne.s32.totalorder %s55, %s56
      %p68 = scmp.eq.s32.totalorder %s25, 1
      %p69 = por %p67, %p68
      %p71 = scmp.ne.s32.totalorder %s56, %s70
      %p72 = scmp.eq.s32.totalorder %s25, 0
      %p73 = por %p71, %p72
      %s75 = sadd.s32 %s74, 1
      %p78 = scmp.eq.s32.totalorder %s19, 1
      %p79 = scmp.ne.s32.totalorder %s74, %s76
      %p80 = scmp.eq.s32.totalorder %s19, 0
      %p81 = por %p79, %p80
      %p82 = scmp.ne.s32.totalorder %s74, %s76
      %p83 = scmp.eq.s32.totalorder %s24, 1
      %p84 = por %p82, %p83
      %p85 = scmp.ne.s32.totalorder %s76, %s77
      %p86 = scmp.eq.s32.totalorder %s24, 0
      %p87 = por %p85, %p86
      %p88 = scmp.ne.s32.totalorder %s76, %s77
      %p89 = scmp.eq.s32.totalorder %s25, 1
      %p90 = por %p88, %p89
      %p92 = scmp.ne.s32.totalorder %s77, %s91
      %p93 = scmp.eq.s32.totalorder %s25, 0
      %p94 = por %p92, %p93
      %s96 = sadd.s32 %s95, 1
      %p99 = scmp.eq.s32.totalorder %s19, 1
      %p100 = scmp.ne.s32.totalorder %s95, %s97
      %p101 = scmp.eq.s32.totalorder %s19, 0
      %p102 = por %p100, %p101
      %p103 = scmp.ne.s32.totalorder %s95, %s97
      %p104 = scmp.eq.s32.totalorder %s24, 1
      %p105 = por %p103, %p104
      %p106 = scmp.ne.s32.totalorder %s97, %s98
      %p107 = scmp.eq.s32.totalorder %s24, 0
      %p108 = por %p106, %p107
      %p109 = scmp.ne.s32.totalorder %s97, %s98
      %p110 = scmp.eq.s32.totalorder %s25, 1
      %p111 = por %p109, %p110
      %p113 = scmp.ne.s32.totalorder %s98, %s112
      %p114 = scmp.eq.s32.totalorder %s25, 0
      %p115 = por %p113, %p114
      %s117 = sadd.s32 %s116, 1
      %p120 = scmp.eq.s32.totalorder %s19, 1
      %p121 = scmp.ne.s32.totalorder %s116, %s118
      %p122 = scmp.eq.s32.totalorder %s19, 0
      %p123 = por %p121, %p122
      %p124 = scmp.ne.s32.totalorder %s116, %s118
      %p125 = scmp.eq.s32.totalorder %s24, 1
      %p126 = por %p124, %p125
      %p127 = scmp.ne.s32.totalorder %s118, %s119
      %p128 = scmp.eq.s32.totalorder %s24, 0
      %p129 = por %p127, %p128
      %p130 = scmp.ne.s32.totalorder %s118, %s119
      %p131 = scmp.eq.s32.totalorder %s25, 1
      %p132 = por %p130, %p131
      %p134 = scmp.ne.s32.totalorder %s119, %s133
      %p135 = scmp.eq.s32.totalorder %s25, 0
      %p136 = por %p134, %p135
      %s138 = sadd.s32 %s137, 1
      %p141 = scmp.eq.s32.totalorder %s19, 1
      %p142 = scmp.ne.s32.totalorder %s137, %s139
      %p143 = scmp.eq.s32.totalorder %s19, 0
      %p144 = por %p142, %p143
      %p145 = scmp.ne.s32.totalorder %s137, %s139
      %p146 = scmp.eq.s32.totalorder %s24, 1
      %p147 = por %p145, %p146
      %p148 = scmp.ne.s32.totalorder %s139, %s140
      %p149 = scmp.eq.s32.totalorder %s24, 0
      %p150 = por %p148, %p149
      %p151 = scmp.ne.s32.totalorder %s139, %s140
      %p152 = scmp.eq.s32.totalorder %s25, 1
      %p153 = por %p151, %p152
      %p155 = scmp.ne.s32.totalorder %s140, %s154
      %p156 = scmp.eq.s32.totalorder %s25, 0
      %p157 = por %p155, %p156
      %s158 = ssub.s32 %s19, %s26
      %p159 = scmp.eq.s32.totalorder %s158, 0
      %s161 = sadd.s32 %s160, 1
      %s162 = scalar_select %p159, %s160, %s161
      %p165 = pneg %p159
      %p166 = scmp.eq.s32.totalorder %s19, 1
      %p167 = por %p165, %p166
      %p168 = scmp.ne.s32.totalorder %s160, %s163
      %p169 = scmp.eq.s32.totalorder %s19, 0
      %p170 = por %p168, %p169
      %p171 = scmp.ne.s32.totalorder %s160, %s163
      %p172 = scmp.eq.s32.totalorder %s24, 1
      %p173 = por %p171, %p172
      %p174 = scmp.ne.s32.totalorder %s163, %s164
      %p175 = scmp.eq.s32.totalorder %s24, 0
      %p176 = por %p174, %p175
      %p177 = scmp.ne.s32.totalorder %s163, %s164
      %p178 = scmp.eq.s32.totalorder %s25, 1
      %p179 = por %p177, %p178
      %p181 = scmp.ne.s32.totalorder %s164, %s180
      %p182 = scmp.eq.s32.totalorder %s25, 0
      %p183 = por %p181, %p182
      %p184 = scmp.le.s32.totalorder 1, %s19
      %p185 = scmp.lt.s32.totalorder %s19, 3
      %p186 = pnand %p184, %p185
      %p187 = pneg %p186
      // Predicated region
      $region9: #{tpu_custom_call.1} parent=5 // pred_check
        _
      $region10: #{tpu_custom_call.1} parent=5 // pred_check_branch
        %189 = sbr.rel (%p186) target = $region12
      $region11: #{tpu_custom_call.1} parent=5 // pred_region
        %s190 = ssub.s32 %s19, 1
        // Predicated region
        $region13: #{tpu_custom_call.1} parent=11 // pred_check
          %p191 = pneg %p66
        $region14: #{tpu_custom_call.1} parent=11 // pred_check_branch
          %193 = sbr.rel (%p191) target = $region16
        $region15: #{tpu_custom_call.1} parent=11 // pred_region
          %s195 = ssub.s32 1024, 1024
          %196 = vsyncadd [#allocation6], %s195
          %s198 = sshll.u32 [#allocation5], 4
          %s199 = int_to_ptr.vmem [resolvable:$true] %s198
          %201 = dma.hbm_to_vmem [thread:$0]  %s1, 1024, %s199, [#allocation6]
        $region16: #{tpu_custom_call.1} parent=11 // pred_fallthru
          _
        // Predicated region
        $region17: #{tpu_custom_call.1} parent=11 // pred_check
          %p202 = pneg %p87
        $region18: #{tpu_custom_call.1} parent=11 // pred_check_branch
          %204 = sbr.rel (%p202) target = $region20
        $region19: #{tpu_custom_call.1} parent=11 // pred_region
          _
        $region20: #{tpu_custom_call.1} parent=11 // pred_fallthru
          _
        // Predicated region
        $region21: #{tpu_custom_call.1} parent=11 // pred_check
          %p205 = pneg %p108
        $region22: #{tpu_custom_call.1} parent=11 // pred_check_branch
          %207 = sbr.rel (%p205) target = $region24
        $region23: #{tpu_custom_call.1} parent=11 // pred_region
          _
        $region24: #{tpu_custom_call.1} parent=11 // pred_fallthru
          _
        // Predicated region
        $region25: #{tpu_custom_call.1} parent=11 // pred_check
          %p208 = pneg %p129
        $region26: #{tpu_custom_call.1} parent=11 // pred_check_branch
          %210 = sbr.rel (%p208) target = $region28
        $region27: #{tpu_custom_call.1} parent=11 // pred_region
          _
        $region28: #{tpu_custom_call.1} parent=11 // pred_fallthru
          _
        // Predicated region
        $region29: #{tpu_custom_call.1} parent=11 // pred_check
          %p211 = pneg %p150
        $region30: #{tpu_custom_call.1} parent=11 // pred_check_branch
          %213 = sbr.rel (%p211) target = $region32
        $region31: #{tpu_custom_call.1} parent=11 // pred_region
          _
        $region32: #{tpu_custom_call.1} parent=11 // pred_fallthru
          _
      $region12: #{tpu_custom_call.1} parent=5 // pred_fallthru
        _
      %p214 = scmp.lt.s32.totalorder %s19, 2
      // Predicated region
      $region33: #{tpu_custom_call.1} parent=5 // pred_check
        %p215 = pneg %p214
      $region34: #{tpu_custom_call.1} parent=5 // pred_check_branch
        %217 = sbr.rel (%p215) target = $region36
      $region35: #{tpu_custom_call.1} parent=5 // pred_region
        // Predicated region
        $region37: #{tpu_custom_call.1} parent=35 // pred_check
          %p218 = pneg %p39
        $region38: #{tpu_custom_call.1} parent=35 // pred_check_branch
          %220 = sbr.rel (%p218) target = $region40
        $region39: #{tpu_custom_call.1} parent=35 // pred_region
          %s221 = sand.u32 %s29, 1
          %s222 = scalar_lea.sflag [#allocation3], %s221
          %s223 = sand.u32 %s29, 1
          %s224 = smul.addr %s223, 64
          %s225 = scalar_lea.vmem [#allocation2], %s224
          %s226 = smul.u32 8, %s19
          %s228 = ssub.s32 1024, 1024
          %229 = vsyncadd %s222, %s228
          %s230 = smul.addr %s226, 128
          %s231 = scalar_lea.hbm %s0, %s230
          %s233 = sshll.u32 %s225, 4
          %s234 = int_to_ptr.vmem [resolvable:$true] %s233
          %236 = dma.hbm_to_vmem [thread:$0]  %s231, 1024, %s234, %s222
        $region40: #{tpu_custom_call.1} parent=35 // pred_fallthru
          _
      $region36: #{tpu_custom_call.1} parent=5 // pred_fallthru
        _
      %p237 = scmp.le.s32.totalorder 1, %s19
      %p238 = scmp.lt.s32.totalorder %s19, 3
      %p239 = pnand %p237, %p238
      %p240 = pneg %p239
      // Predicated region
      $region41: #{tpu_custom_call.1} parent=5 // pred_check
        _
      $region42: #{tpu_custom_call.1} parent=5 // pred_check_branch
        %242 = sbr.rel (%p239) target = $region44
      $region43: #{tpu_custom_call.1} parent=5 // pred_region
        %s243 = ssub.s32 %s19, 1
        %s244 = sand.u32 %s32, 1
        %s245 = scalar_lea.sflag [#allocation3], %s244
        %s246 = sand.u32 %s32, 1
        %s247 = smul.addr %s246, 64
        %s248 = scalar_lea.vmem [#allocation2], %s247
        // Predicated region
        $region45: #{tpu_custom_call.1} parent=43 // pred_check
          %p249 = pneg %p45
        $region46: #{tpu_custom_call.1} parent=43 // pred_check_branch
          %251 = sbr.rel (%p249) target = $region48
        $region47: #{tpu_custom_call.1} parent=43 // pred_region
          %252 = dma.done %s245, 1024
        $region48: #{tpu_custom_call.1} parent=43 // pred_fallthru
          _
        // Predicated region
        $region49: #{tpu_custom_call.1} parent=43 // pred_check
          %p253 = pneg %p66
        $region50: #{tpu_custom_call.1} parent=43 // pred_check_branch
          %255 = sbr.rel (%p253) target = $region52
        $region51: #{tpu_custom_call.1} parent=43 // pred_region
          %256 = dma.done [#allocation6], 1024
        $region52: #{tpu_custom_call.1} parent=43 // pred_fallthru
          _
        %s257 = sand.u32 %s32, 1
        %s258 = scalar_lea.sflag [#allocation3], %s257
        %s259 = sand.u32 %s32, 1
        %s260 = smul.addr %s259, 64
        %s261 = scalar_lea.vmem [#allocation2], %s260
        %p262 = pneg %p45
        %p263 = pneg %p42
        %p264 = pneg %p66
        %p265 = pneg %p63
        %p266 = pneg %p87
        %p267 = pneg %p84
        %p268 = pneg %p108
        %p269 = pneg %p105
        %p270 = pneg %p129
        %p271 = pneg %p126
        %p272 = pneg %p150
        %p273 = pneg %p147
        %p274 = pneg %p176
        %p275 = pneg %p173
        %s276 = sand.u32 %s163, 1
        %s277 = scalar_lea.sflag [#allocation4], %s276
        %s278 = sand.u32 %s163, 1
        %s279 = smul.addr %s278, 64
        %s280 = scalar_lea.vmem [#allocation7], %s279
        %s281 = smul.u32 8, %s24
        %s282 = smul.u32 8, %s24
        %v284 = vld [vmem:[%s248] sm:$0xff]
        %v285 = vld [vmem:[%s248 + $0x8] sm:$0xff]
        %v286 = vld [vmem:[%s248 + $0x10] sm:$0xff]
        %v287 = vld [vmem:[%s248 + $0x18] sm:$0xff]
        %v288 = vld [vmem:[%s248 + $0x20] sm:$0xff]
        %v289 = vld [vmem:[%s248 + $0x28] sm:$0xff]
        %v290 = vld [vmem:[%s248 + $0x30] sm:$0xff]
        %v291 = vld [vmem:[%s248 + $0x38] sm:$0xff]
        %v292 = vld [vmem:[#allocation5] sm:$0xff]
        %v293 = vld [vmem:[#allocation5 + $0x8] sm:$0xff]
        %v294 = vld [vmem:[#allocation5 + $0x10] sm:$0xff]
        %v295 = vld [vmem:[#allocation5 + $0x18] sm:$0xff]
        %v296 = vld [vmem:[#allocation5 + $0x20] sm:$0xff]
        %v297 = vld [vmem:[#allocation5 + $0x28] sm:$0xff]
        %v298 = vld [vmem:[#allocation5 + $0x30] sm:$0xff]
        %v299 = vld [vmem:[#allocation5 + $0x38] sm:$0xff]
        %v300 = vld [vmem:[%s2] sm:$0xf]
        %v301 = vld [vmem:[%s3] sm:$0xff]
        %302 = vrot.lane.b32.xlu0 %v284, 17
        %v303 = vpop.permute.xlu0 %302
        %304 = vrot.lane.b32.xlu0 %v285, 17
        %v305 = vpop.permute.xlu0 %304
        %306 = vrot.lane.b32.xlu0 %v286, 17
        %v307 = vpop.permute.xlu0 %306
        %308 = vrot.lane.b32.xlu0 %v287, 17
        %v309 = vpop.permute.xlu0 %308
        %310 = vrot.lane.b32.xlu0 %v288, 17
        %v311 = vpop.permute.xlu0 %310
        %312 = vrot.lane.b32.xlu0 %v289, 17
        %v313 = vpop.permute.xlu0 %312
        %314 = vrot.lane.b32.xlu0 %v290, 17
        %v315 = vpop.permute.xlu0 %314
        %316 = vrot.lane.b32.xlu0 %v291, 17
        %v317 = vpop.permute.xlu0 %316
        %v318 = vlaneseq
        %v319 = vand.u32 %v318, 127
        %vm320 = vcmp.lt.s32.totalorder %v319, 17
        %v321 = vsel %vm320, %v315, %v317
        %v322 = vsel %vm320, %v313, %v315
        %v323 = vsel %vm320, %v311, %v313
        %v324 = vsel %vm320, %v309, %v311
        %v325 = vsel %vm320, %v307, %v309
        %v326 = vsel %vm320, %v305, %v307
        %v327 = vsel %vm320, %v303, %v305
        %v328 = vsel %vm320, %v317, %v303
        %v329 = vlaneseq
        %v330 = vshrl.u32 %v329, 7
        %v331 = vsub.s32 0, %v330
        %v332 = vrot.slane %v292, %v331
        %v333 = vlaneseq
        %v334 = vshrl.u32 %v333, 7
        %v335 = vsub.s32 0, %v334
        %v336 = vrot.slane %v293, %v335
        %v337 = vlaneseq
        %v338 = vshrl.u32 %v337, 7
        %v339 = vsub.s32 0, %v338
        %v340 = vrot.slane %v294, %v339
        %v341 = vlaneseq
        %v342 = vshrl.u32 %v341, 7
        %v343 = vsub.s32 0, %v342
        %v344 = vrot.slane %v295, %v343
        %v345 = vlaneseq
        %v346 = vshrl.u32 %v345, 7
        %v347 = vsub.s32 0, %v346
        %v348 = vrot.slane %v296, %v347
        %v349 = vlaneseq
        %v350 = vshrl.u32 %v349, 7
        %v351 = vsub.s32 0, %v350
        %v352 = vrot.slane %v297, %v351
        %v353 = vlaneseq
        %v354 = vshrl.u32 %v353, 7
        %v355 = vsub.s32 0, %v354
        %v356 = vrot.slane %v298, %v355
        %v357 = vlaneseq
        %v358 = vshrl.u32 %v357, 7
        %v359 = vsub.s32 0, %v358
        %v360 = vrot.slane %v299, %v359
        %v361 = vmul.f32 %v328, %v332
        %v362 = vmul.f32 %v327, %v336
        %v363 = vmul.f32 %v326, %v340
        %v364 = vmul.f32 %v325, %v344
        %v365 = vmul.f32 %v324, %v348
        %v366 = vmul.f32 %v323, %v352
        %v367 = vmul.f32 %v322, %v356
        %v368 = vmul.f32 %v321, %v360
        %369 = vrot.lane.b32.xlu0 %v284, 16
        %v370 = vpop.permute.xlu0 %369
        %371 = vrot.lane.b32.xlu0 %v285, 16
        %v372 = vpop.permute.xlu0 %371
        %373 = vrot.lane.b32.xlu0 %v286, 16
        %v374 = vpop.permute.xlu0 %373
        %375 = vrot.lane.b32.xlu0 %v287, 16
        %v376 = vpop.permute.xlu0 %375
        %377 = vrot.lane.b32.xlu0 %v288, 16
        %v378 = vpop.permute.xlu0 %377
        %379 = vrot.lane.b32.xlu0 %v289, 16
        %v380 = vpop.permute.xlu0 %379
        %381 = vrot.lane.b32.xlu0 %v290, 16
        %v382 = vpop.permute.xlu0 %381
        %383 = vrot.lane.b32.xlu0 %v291, 16
        %v384 = vpop.permute.xlu0 %383
        %vm385 = vcmp.lt.s32.totalorder %v319, 16
        %v386 = vsel %vm385, %v382, %v384
        %v387 = vsel %vm385, %v380, %v382
        %v388 = vsel %vm385, %v378, %v380
        %v389 = vsel %vm385, %v376, %v378
        %v390 = vsel %vm385, %v374, %v376
        %v391 = vsel %vm385, %v372, %v374
        %v392 = vsel %vm385, %v370, %v372
        %v393 = vsel %vm385, %v384, %v370
        %v394 = vlaneseq
        %v395 = vshrl.u32 %v394, 7
        %v396 = vsub.s32 1, %v395
        %v397 = vrot.slane %v292, %v396
        %v398 = vlaneseq
        %v399 = vshrl.u32 %v398, 7
        %v400 = vsub.s32 1, %v399
        %v401 = vrot.slane %v293, %v400
        %v402 = vlaneseq
        %v403 = vshrl.u32 %v402, 7
        %v404 = vsub.s32 1, %v403
        %v405 = vrot.slane %v294, %v404
        %v406 = vlaneseq
        %v407 = vshrl.u32 %v406, 7
        %v408 = vsub.s32 1, %v407
        %v409 = vrot.slane %v295, %v408
        %v410 = vlaneseq
        %v411 = vshrl.u32 %v410, 7
        %v412 = vsub.s32 1, %v411
        %v413 = vrot.slane %v296, %v412
        %v414 = vlaneseq
        %v415 = vshrl.u32 %v414, 7
        %v416 = vsub.s32 1, %v415
        %v417 = vrot.slane %v297, %v416
        %v418 = vlaneseq
        %v419 = vshrl.u32 %v418, 7
        %v420 = vsub.s32 1, %v419
        %v421 = vrot.slane %v298, %v420
        %v422 = vlaneseq
        %v423 = vshrl.u32 %v422, 7
        %v424 = vsub.s32 1, %v423
        %v425 = vrot.slane %v299, %v424
        %v426 = vmul.f32 %v393, %v397
        %v427 = vmul.f32 %v392, %v401
        %v428 = vmul.f32 %v391, %v405
        %v429 = vmul.f32 %v390, %v409
        %v430 = vmul.f32 %v389, %v413
        %v431 = vmul.f32 %v388, %v417
        %v432 = vmul.f32 %v387, %v421
        %v433 = vmul.f32 %v386, %v425
        %434 = vrot.lane.b32.xlu0 %v284, 15
        %v435 = vpop.permute.xlu0 %434
        %436 = vrot.lane.b32.xlu0 %v285, 15
        %v437 = vpop.permute.xlu0 %436
        %438 = vrot.lane.b32.xlu0 %v286, 15
        %v439 = vpop.permute.xlu0 %438
        %440 = vrot.lane.b32.xlu0 %v287, 15
        %v441 = vpop.permute.xlu0 %440
        %442 = vrot.lane.b32.xlu0 %v288, 15
        %v443 = vpop.permute.xlu0 %442
        %444 = vrot.lane.b32.xlu0 %v289, 15
        %v445 = vpop.permute.xlu0 %444
        %446 = vrot.lane.b32.xlu0 %v290, 15
        %v447 = vpop.permute.xlu0 %446
        %448 = vrot.lane.b32.xlu0 %v291, 15
        %v449 = vpop.permute.xlu0 %448
        %vm450 = vcmp.lt.s32.totalorder %v319, 15
        %v451 = vsel %vm450, %v447, %v449
        %v452 = vsel %vm450, %v445, %v447
        %v453 = vsel %vm450, %v443, %v445
        %v454 = vsel %vm450, %v441, %v443
        %v455 = vsel %vm450, %v439, %v441
        %v456 = vsel %vm450, %v437, %v439
        %v457 = vsel %vm450, %v435, %v437
        %v458 = vsel %vm450, %v449, %v435
        %v459 = vlaneseq
        %v460 = vshrl.u32 %v459, 7
        %v461 = vsub.s32 2, %v460
        %v462 = vrot.slane %v292, %v461
        %v463 = vlaneseq
        %v464 = vshrl.u32 %v463, 7
        %v465 = vsub.s32 2, %v464
        %v466 = vrot.slane %v293, %v465
        %v467 = vlaneseq
        %v468 = vshrl.u32 %v467, 7
        %v469 = vsub.s32 2, %v468
        %v470 = vrot.slane %v294, %v469
        %v471 = vlaneseq
        %v472 = vshrl.u32 %v471, 7
        %v473 = vsub.s32 2, %v472
        %v474 = vrot.slane %v295, %v473
        %v475 = vlaneseq
        %v476 = vshrl.u32 %v475, 7
        %v477 = vsub.s32 2, %v476
        %v478 = vrot.slane %v296, %v477
        %v479 = vlaneseq
        %v480 = vshrl.u32 %v479, 7
        %v481 = vsub.s32 2, %v480
        %v482 = vrot.slane %v297, %v481
        %v483 = vlaneseq
        %v484 = vshrl.u32 %v483, 7
        %v485 = vsub.s32 2, %v484
        %v486 = vrot.slane %v298, %v485
        %v487 = vlaneseq
        %v488 = vshrl.u32 %v487, 7
        %v489 = vsub.s32 2, %v488
        %v490 = vrot.slane %v299, %v489
        %v491 = vmul.f32 %v458, %v462
        %v492 = vmul.f32 %v457, %v466
        %v493 = vmul.f32 %v456, %v470
        %v494 = vmul.f32 %v455, %v474
        %v495 = vmul.f32 %v454, %v478
        %v496 = vmul.f32 %v453, %v482
        %v497 = vmul.f32 %v452, %v486
        %v498 = vmul.f32 %v451, %v490
        %499 = vrot.lane.b32.xlu0 %v284, 1
        %v500 = vpop.permute.xlu0 %499
        %501 = vrot.lane.b32.xlu0 %v285, 1
        %v502 = vpop.permute.xlu0 %501
        %503 = vrot.lane.b32.xlu0 %v286, 1
        %v504 = vpop.permute.xlu0 %503
        %505 = vrot.lane.b32.xlu0 %v287, 1
        %v506 = vpop.permute.xlu0 %505
        %507 = vrot.lane.b32.xlu0 %v288, 1
        %v508 = vpop.permute.xlu0 %507
        %509 = vrot.lane.b32.xlu0 %v289, 1
        %v510 = vpop.permute.xlu0 %509
        %511 = vrot.lane.b32.xlu0 %v290, 1
        %v512 = vpop.permute.xlu0 %511
        %513 = vrot.lane.b32.xlu0 %v291, 1
        %v514 = vpop.permute.xlu0 %513
        %vm515 = vcmp.lt.s32.totalorder %v319, 1
        %v516 = vsel %vm515, %v512, %v514
        %v517 = vsel %vm515, %v510, %v512
        %v518 = vsel %vm515, %v508, %v510
        %v519 = vsel %vm515, %v506, %v508
        %v520 = vsel %vm515, %v504, %v506
        %v521 = vsel %vm515, %v502, %v504
        %v522 = vsel %vm515, %v500, %v502
        %v523 = vsel %vm515, %v514, %v500
        %v524 = vlaneseq
        %v525 = vshrl.u32 %v524, 7
        %v526 = vsub.s32 3, %v525
        %v527 = vrot.slane %v292, %v526
        %v528 = vlaneseq
        %v529 = vshrl.u32 %v528, 7
        %v530 = vsub.s32 3, %v529
        %v531 = vrot.slane %v293, %v530
        %v532 = vlaneseq
        %v533 = vshrl.u32 %v532, 7
        %v534 = vsub.s32 3, %v533
        %v535 = vrot.slane %v294, %v534
        %v536 = vlaneseq
        %v537 = vshrl.u32 %v536, 7
        %v538 = vsub.s32 3, %v537
        %v539 = vrot.slane %v295, %v538
        %v540 = vlaneseq
        %v541 = vshrl.u32 %v540, 7
        %v542 = vsub.s32 3, %v541
        %v543 = vrot.slane %v296, %v542
        %v544 = vlaneseq
        %v545 = vshrl.u32 %v544, 7
        %v546 = vsub.s32 3, %v545
        %v547 = vrot.slane %v297, %v546
        %v548 = vlaneseq
        %v549 = vshrl.u32 %v548, 7
        %v550 = vsub.s32 3, %v549
        %v551 = vrot.slane %v298, %v550
        %v552 = vlaneseq
        %v553 = vshrl.u32 %v552, 7
        %v554 = vsub.s32 3, %v553
        %v555 = vrot.slane %v299, %v554
        %v556 = vmul.f32 %v523, %v527
        %v557 = vmul.f32 %v522, %v531
        %v558 = vmul.f32 %v521, %v535
        %v559 = vmul.f32 %v520, %v539
        %v560 = vmul.f32 %v519, %v543
        %v561 = vmul.f32 %v518, %v547
        %v562 = vmul.f32 %v517, %v551
        %v563 = vmul.f32 %v516, %v555
        %564 = vrot.lane.b32.xlu0 %v284, 127
        %v565 = vpop.permute.xlu0 %564
        %566 = vrot.lane.b32.xlu0 %v285, 127
        %v567 = vpop.permute.xlu0 %566
        %568 = vrot.lane.b32.xlu0 %v286, 127
        %v569 = vpop.permute.xlu0 %568
        %570 = vrot.lane.b32.xlu0 %v287, 127
        %v571 = vpop.permute.xlu0 %570
        %572 = vrot.lane.b32.xlu0 %v288, 127
        %v573 = vpop.permute.xlu0 %572
        %574 = vrot.lane.b32.xlu0 %v289, 127
        %v575 = vpop.permute.xlu0 %574
        %576 = vrot.lane.b32.xlu0 %v290, 127
        %v577 = vpop.permute.xlu0 %576
        %578 = vrot.lane.b32.xlu0 %v291, 127
        %v579 = vpop.permute.xlu0 %578
        %vm580 = vcmp.lt.s32.totalorder %v319, 127
        %v581 = vsel %vm580, %v577, %v579
        %v582 = vsel %vm580, %v575, %v577
        %v583 = vsel %vm580, %v573, %v575
        %v584 = vsel %vm580, %v571, %v573
        %v585 = vsel %vm580, %v569, %v571
        %v586 = vsel %vm580, %v567, %v569
        %v587 = vsel %vm580, %v565, %v567
        %v588 = vsel %vm580, %v579, %v565
        %v589 = vlaneseq
        %v590 = vshrl.u32 %v589, 7
        %v591 = vsub.s32 4, %v590
        %v592 = vrot.slane %v292, %v591
        %v593 = vlaneseq
        %v594 = vshrl.u32 %v593, 7
        %v595 = vsub.s32 4, %v594
        %v596 = vrot.slane %v293, %v595
        %v597 = vlaneseq
        %v598 = vshrl.u32 %v597, 7
        %v599 = vsub.s32 4, %v598
        %v600 = vrot.slane %v294, %v599
        %v601 = vlaneseq
        %v602 = vshrl.u32 %v601, 7
        %v603 = vsub.s32 4, %v602
        %v604 = vrot.slane %v295, %v603
        %v605 = vlaneseq
        %v606 = vshrl.u32 %v605, 7
        %v607 = vsub.s32 4, %v606
        %v608 = vrot.slane %v296, %v607
        %v609 = vlaneseq
        %v610 = vshrl.u32 %v609, 7
        %v611 = vsub.s32 4, %v610
        %v612 = vrot.slane %v297, %v611
        %v613 = vlaneseq
        %v614 = vshrl.u32 %v613, 7
        %v615 = vsub.s32 4, %v614
        %v616 = vrot.slane %v298, %v615
        %v617 = vlaneseq
        %v618 = vshrl.u32 %v617, 7
        %v619 = vsub.s32 4, %v618
        %v620 = vrot.slane %v299, %v619
        %v621 = vmul.f32 %v587, %v592
        %v622 = vmul.f32 %v586, %v596
        %v623 = vmul.f32 %v585, %v600
        %v624 = vmul.f32 %v584, %v604
        %v625 = vmul.f32 %v583, %v608
        %v626 = vmul.f32 %v582, %v612
        %v627 = vmul.f32 %v581, %v616
        %v628 = vmul.f32 %v588, %v620
        %629 = vrot.lane.b32.xlu0 %v284, 113
        %v630 = vpop.permute.xlu0 %629
        %631 = vrot.lane.b32.xlu0 %v285, 113
        %v632 = vpop.permute.xlu0 %631
        %633 = vrot.lane.b32.xlu0 %v286, 113
        %v634 = vpop.permute.xlu0 %633
        %635 = vrot.lane.b32.xlu0 %v287, 113
        %v636 = vpop.permute.xlu0 %635
        %637 = vrot.lane.b32.xlu0 %v288, 113
        %v638 = vpop.permute.xlu0 %637
        %639 = vrot.lane.b32.xlu0 %v289, 113
        %v640 = vpop.permute.xlu0 %639
        %641 = vrot.lane.b32.xlu0 %v290, 113
        %v642 = vpop.permute.xlu0 %641
        %643 = vrot.lane.b32.xlu0 %v291, 113
        %v644 = vpop.permute.xlu0 %643
        %vm645 = vcmp.lt.s32.totalorder %v319, 113
        %v646 = vsel %vm645, %v642, %v644
        %v647 = vsel %vm645, %v640, %v642
        %v648 = vsel %vm645, %v638, %v640
        %v649 = vsel %vm645, %v636, %v638
        %v650 = vsel %vm645, %v634, %v636
        %v651 = vsel %vm645, %v632, %v634
        %v652 = vsel %vm645, %v630, %v632
        %v653 = vsel %vm645, %v644, %v630
        %v654 = vlaneseq
        %v655 = vshrl.u32 %v654, 7
        %v656 = vsub.s32 5, %v655
        %v657 = vrot.slane %v292, %v656
        %v658 = vlaneseq
        %v659 = vshrl.u32 %v658, 7
        %v660 = vsub.s32 5, %v659
        %v661 = vrot.slane %v293, %v660
        %v662 = vlaneseq
        %v663 = vshrl.u32 %v662, 7
        %v664 = vsub.s32 5, %v663
        %v665 = vrot.slane %v294, %v664
        %v666 = vlaneseq
        %v667 = vshrl.u32 %v666, 7
        %v668 = vsub.s32 5, %v667
        %v669 = vrot.slane %v295, %v668
        %v670 = vlaneseq
        %v671 = vshrl.u32 %v670, 7
        %v672 = vsub.s32 5, %v671
        %v673 = vrot.slane %v296, %v672
        %v674 = vlaneseq
        %v675 = vshrl.u32 %v674, 7
        %v676 = vsub.s32 5, %v675
        %v677 = vrot.slane %v297, %v676
        %v678 = vlaneseq
        %v679 = vshrl.u32 %v678, 7
        %v680 = vsub.s32 5, %v679
        %v681 = vrot.slane %v298, %v680
        %v682 = vlaneseq
        %v683 = vshrl.u32 %v682, 7
        %v684 = vsub.s32 5, %v683
        %v685 = vrot.slane %v299, %v684
        %v686 = vmul.f32 %v652, %v657
        %v687 = vmul.f32 %v651, %v661
        %v688 = vmul.f32 %v650, %v665
        %v689 = vmul.f32 %v649, %v669
        %v690 = vmul.f32 %v648, %v673
        %v691 = vmul.f32 %v647, %v677
        %v692 = vmul.f32 %v646, %v681
        %v693 = vmul.f32 %v653, %v685
        %694 = vrot.lane.b32.xlu0 %v284, 112
        %v695 = vpop.permute.xlu0 %694
        %696 = vrot.lane.b32.xlu0 %v285, 112
        %v697 = vpop.permute.xlu0 %696
        %698 = vrot.lane.b32.xlu0 %v286, 112
        %v699 = vpop.permute.xlu0 %698
        %700 = vrot.lane.b32.xlu0 %v287, 112
        %v701 = vpop.permute.xlu0 %700
        %702 = vrot.lane.b32.xlu0 %v288, 112
        %v703 = vpop.permute.xlu0 %702
        %704 = vrot.lane.b32.xlu0 %v289, 112
        %v705 = vpop.permute.xlu0 %704
        %706 = vrot.lane.b32.xlu0 %v290, 112
        %v707 = vpop.permute.xlu0 %706
        %708 = vrot.lane.b32.xlu0 %v291, 112
        %v709 = vpop.permute.xlu0 %708
        %vm710 = vcmp.lt.s32.totalorder %v319, 112
        %v711 = vsel %vm710, %v707, %v709
        %v712 = vsel %vm710, %v705, %v707
        %v713 = vsel %vm710, %v703, %v705
        %v714 = vsel %vm710, %v701, %v703
        %v715 = vsel %vm710, %v699, %v701
        %v716 = vsel %vm710, %v697, %v699
        %v717 = vsel %vm710, %v695, %v697
        %v718 = vsel %vm710, %v709, %v695
        %v719 = vlaneseq
        %v720 = vshrl.u32 %v719, 7
        %v721 = vsub.s32 6, %v720
        %v722 = vrot.slane %v292, %v721
        %v723 = vlaneseq
        %v724 = vshrl.u32 %v723, 7
        %v725 = vsub.s32 6, %v724
        %v726 = vrot.slane %v293, %v725
        %v727 = vlaneseq
        %v728 = vshrl.u32 %v727, 7
        %v729 = vsub.s32 6, %v728
        %v730 = vrot.slane %v294, %v729
        %v731 = vlaneseq
        %v732 = vshrl.u32 %v731, 7
        %v733 = vsub.s32 6, %v732
        %v734 = vrot.slane %v295, %v733
        %v735 = vlaneseq
        %v736 = vshrl.u32 %v735, 7
        %v737 = vsub.s32 6, %v736
        %v738 = vrot.slane %v296, %v737
        %v739 = vlaneseq
        %v740 = vshrl.u32 %v739, 7
        %v741 = vsub.s32 6, %v740
        %v742 = vrot.slane %v297, %v741
        %v743 = vlaneseq
        %v744 = vshrl.u32 %v743, 7
        %v745 = vsub.s32 6, %v744
        %v746 = vrot.slane %v298, %v745
        %v747 = vlaneseq
        %v748 = vshrl.u32 %v747, 7
        %v749 = vsub.s32 6, %v748
        %v750 = vrot.slane %v299, %v749
        %v751 = vmul.f32 %v717, %v722
        %v752 = vmul.f32 %v716, %v726
        %v753 = vmul.f32 %v715, %v730
        %v754 = vmul.f32 %v714, %v734
        %v755 = vmul.f32 %v713, %v738
        %v756 = vmul.f32 %v712, %v742
        %v757 = vmul.f32 %v711, %v746
        %v758 = vmul.f32 %v718, %v750
        %759 = vrot.lane.b32.xlu0 %v284, 111
        %v760 = vpop.permute.xlu0 %759
        %761 = vrot.lane.b32.xlu0 %v285, 111
        %v762 = vpop.permute.xlu0 %761
        %763 = vrot.lane.b32.xlu0 %v286, 111
        %v764 = vpop.permute.xlu0 %763
        %765 = vrot.lane.b32.xlu0 %v287, 111
        %v766 = vpop.permute.xlu0 %765
        %767 = vrot.lane.b32.xlu0 %v288, 111
        %v768 = vpop.permute.xlu0 %767
        %769 = vrot.lane.b32.xlu0 %v289, 111
        %v770 = vpop.permute.xlu0 %769
        %771 = vrot.lane.b32.xlu0 %v290, 111
        %v772 = vpop.permute.xlu0 %771
        %773 = vrot.lane.b32.xlu0 %v291, 111
        %v774 = vpop.permute.xlu0 %773
        %vm775 = vcmp.lt.s32.totalorder %v319, 111
        %v776 = vsel %vm775, %v772, %v774
        %v777 = vsel %vm775, %v770, %v772
        %v778 = vsel %vm775, %v768, %v770
        %v779 = vsel %vm775, %v766, %v768
        %v780 = vsel %vm775, %v764, %v766
        %v781 = vsel %vm775, %v762, %v764
        %v782 = vsel %vm775, %v760, %v762
        %v783 = vsel %vm775, %v774, %v760
        %v784 = vlaneseq
        %v785 = vshrl.u32 %v784, 7
        %v786 = vsub.s32 7, %v785
        %v787 = vrot.slane %v292, %v786
        %v788 = vlaneseq
        %v789 = vshrl.u32 %v788, 7
        %v790 = vsub.s32 7, %v789
        %v791 = vrot.slane %v293, %v790
        %v792 = vlaneseq
        %v793 = vshrl.u32 %v792, 7
        %v794 = vsub.s32 7, %v793
        %v795 = vrot.slane %v294, %v794
        %v796 = vlaneseq
        %v797 = vshrl.u32 %v796, 7
        %v798 = vsub.s32 7, %v797
        %v799 = vrot.slane %v295, %v798
        %v800 = vlaneseq
        %v801 = vshrl.u32 %v800, 7
        %v802 = vsub.s32 7, %v801
        %v803 = vrot.slane %v296, %v802
        %v804 = vlaneseq
        %v805 = vshrl.u32 %v804, 7
        %v806 = vsub.s32 7, %v805
        %v807 = vrot.slane %v297, %v806
        %v808 = vlaneseq
        %v809 = vshrl.u32 %v808, 7
        %v810 = vsub.s32 7, %v809
        %v811 = vrot.slane %v298, %v810
        %v812 = vlaneseq
        %v813 = vshrl.u32 %v812, 7
        %v814 = vsub.s32 7, %v813
        %v815 = vrot.slane %v299, %v814
        %v816 = vmul.f32 %v782, %v787
        %v817 = vmul.f32 %v781, %v791
        %v818 = vmul.f32 %v780, %v795
        %v819 = vmul.f32 %v779, %v799
        %v820 = vmul.f32 %v778, %v803
        %v821 = vmul.f32 %v777, %v807
        %v822 = vmul.f32 %v776, %v811
        %v823 = vmul.f32 %v783, %v815
        %v824 = vpack.c.bf16 %v426, %v361
        %v825 = vpack.c.bf16 %v427, %v362
        %v826 = vpack.c.bf16 %v428, %v363
        %v827 = vpack.c.bf16 %v429, %v364
        %v828 = vpack.c.bf16 %v430, %v365
        %v829 = vpack.c.bf16 %v431, %v366
        %v830 = vpack.c.bf16 %v432, %v367
        %v831 = vpack.c.bf16 %v433, %v368
        %v832 = vpack.c.bf16 %v556, %v491
        %v833 = vpack.c.bf16 %v557, %v492
        %v834 = vpack.c.bf16 %v558, %v493
        %v835 = vpack.c.bf16 %v559, %v494
        %v836 = vpack.c.bf16 %v560, %v495
        %v837 = vpack.c.bf16 %v561, %v496
        %v838 = vpack.c.bf16 %v562, %v497
        %v839 = vpack.c.bf16 %v563, %v498
        %v840 = vpack.c.bf16 %v621, %v284
        %v841 = vpack.c.bf16 %v622, %v285
        %v842 = vpack.c.bf16 %v623, %v286
        %v843 = vpack.c.bf16 %v624, %v287
        %v844 = vpack.c.bf16 %v625, %v288
        %v845 = vpack.c.bf16 %v626, %v289
        %v846 = vpack.c.bf16 %v627, %v290
        %v847 = vpack.c.bf16 %v628, %v291
        %v848 = vpack.c.bf16 %v751, %v686
        %v849 = vpack.c.bf16 %v752, %v687
        %v850 = vpack.c.bf16 %v753, %v688
        %v851 = vpack.c.bf16 %v754, %v689
        %v852 = vpack.c.bf16 %v755, %v690
        %v853 = vpack.c.bf16 %v756, %v691
        %v854 = vpack.c.bf16 %v757, %v692
        %v855 = vpack.c.bf16 %v758, %v693
        %v856 = vpack.c.bf16 %v816, %v816
        %v857 = vpack.c.bf16 %v817, %v817
        %v858 = vpack.c.bf16 %v818, %v818
        %v859 = vpack.c.bf16 %v819, %v819
        %v860 = vpack.c.bf16 %v820, %v820
        %v861 = vpack.c.bf16 %v821, %v821
        %v862 = vpack.c.bf16 %v822, %v822
        %v863 = vpack.c.bf16 %v823, %v823
        %865 = vset.pattern.permute.xlu0 0
        %866 = vperm.xlu0 %865, %v301
        %v867 = vpop.permute.xlu0 %866
        %vm869 = vcmask 588800
        %v871 = vsel %vm869, %v300, 0
        %vm873 = vcmask 1043456
        %v875 = vsel %vm873, %v856, 0
        %v878 = vsel %vm873, %v857, 0
        %v881 = vsel %vm873, %v858, 0
        %v884 = vsel %vm873, %v859, 0
        %v887 = vsel %vm873, %v860, 0
        %v890 = vsel %vm873, %v861, 0
        %v893 = vsel %vm873, %v862, 0
        %v896 = vsel %vm873, %v863, 0
        %898 = vmatprep.subr.bf16.mxu0 %v825
        %899 = vmatpush1.bf16.msra.mxu0 %v824
        %900 = vmatprep.subr.bf16.mxu0 %v833
        %901 = vmatpush1.bf16.msra.mxu0 %v832
        %902 = vmatprep.subr.bf16.mxu0 %v841
        %903 = vmatpush1.bf16.msra.mxu0 %v840
        %904 = vmatprep.subr.bf16.mxu0 %v849
        %905 = vmatpush1.bf16.msra.mxu0 %v848
        %906 = vmatprep.subr.bf16.mxu0 %v878
        %907 = vmatpush1.bf16.msra.mxu0 %v875
        %908 = vmatprep.subr.bf16.mxu0 0
        %909 = vmatpush1.bf16.msra.mxu0 0
        %910 = vmatprep.subr.bf16.mxu0 0
        %911 = vmatpush1.bf16.msra.mxu0 0
        %912 = vmatprep.subr.bf16.mxu0 0
        %913 = vmatpush1.bf16.msra.mxu0 0
        %914 = vmatprep.subr.bf16.mxu0 0
        %915 = vmatpush1.bf16.msra.mxu0 0
        %916 = vmatprep.subr.bf16.mxu0 0
        %917 = vmatpush1.bf16.msra.mxu0 0
        %918 = vmatprep.subr.bf16.mxu0 0
        %919 = vmatpush1.bf16.msra.mxu0 0
        %920 = vmatprep.subr.bf16.mxu0 0
        %921 = vmatpush1.bf16.msra.mxu0 0
        %922 = vmatprep.subr.bf16.mxu0 0
        %923 = vmatpush1.bf16.msra.mxu0 0
        %924 = vmatprep.subr.bf16.mxu0 0
        %925 = vmatpush1.bf16.msra.mxu0 0
        %926 = vmatprep.subr.bf16.mxu0 0
        %927 = vmatpush1.bf16.msra.mxu0 0
        %928 = vmatprep.subr.bf16.mxu0 0
        %929 = vmatpush1.bf16.msra.mxu0 0
        %930 = vmatprep.mubr.bf16.mxu0 0
        %931 = vmatmul.mubr.bf16.gmra.mrb[0].mxu0 %v871
        %v932 = vpop.f32.mrb[0].mxu0
        %v933 = vadd.f32 %v867, %v932
        %v934 = vpop.f32.mrb[0].mxu0
        %v935 = vadd.f32 %v867, %v934
        %v936 = vpop.f32.mrb[0].mxu0
        %v937 = vpop.f32.mrb[0].mxu0
        %938 = vdwg.mxu0
        %939 = vmatprep.subr.bf16.mxu0 %v827
        %940 = vmatpush1.bf16.msra.mxu0 %v826
        %941 = vmatprep.subr.bf16.mxu0 %v835
        %942 = vmatpush1.bf16.msra.mxu0 %v834
        %943 = vmatprep.subr.bf16.mxu0 %v843
        %944 = vmatpush1.bf16.msra.mxu0 %v842
        %945 = vmatprep.subr.bf16.mxu0 %v851
        %946 = vmatpush1.bf16.msra.mxu0 %v850
        %947 = vmatprep.subr.bf16.mxu0 %v884
        %948 = vmatpush1.bf16.msra.mxu0 %v881
        %949 = vmatprep.subr.bf16.mxu0 0
        %950 = vmatpush1.bf16.msra.mxu0 0
        %951 = vmatprep.subr.bf16.mxu0 0
        %952 = vmatpush1.bf16.msra.mxu0 0
        %953 = vmatprep.subr.bf16.mxu0 0
        %954 = vmatpush1.bf16.msra.mxu0 0
        %955 = vmatprep.subr.bf16.mxu0 0
        %956 = vmatpush1.bf16.msra.mxu0 0
        %957 = vmatprep.subr.bf16.mxu0 0
        %958 = vmatpush1.bf16.msra.mxu0 0
        %959 = vmatprep.subr.bf16.mxu0 0
        %960 = vmatpush1.bf16.msra.mxu0 0
        %961 = vmatprep.subr.bf16.mxu0 0
        %962 = vmatpush1.bf16.msra.mxu0 0
        %963 = vmatprep.subr.bf16.mxu0 0
        %964 = vmatpush1.bf16.msra.mxu0 0
        %965 = vmatprep.subr.bf16.mxu0 0
        %966 = vmatpush1.bf16.msra.mxu0 0
        %967 = vmatprep.subr.bf16.mxu0 0
        %968 = vmatpush1.bf16.msra.mxu0 0
        %969 = vmatprep.subr.bf16.mxu0 0
        %970 = vmatpush1.bf16.msra.mxu0 0
        %971 = vmatprep.mubr.bf16.mxu0 0
        %972 = vmatmul.mubr.bf16.gmra.mrb[0].mxu0 %v871
        %v973 = vpop.f32.mrb[0].mxu0
        %v974 = vadd.f32 %v867, %v973
        %v975 = vpop.f32.mrb[0].mxu0
        %v976 = vadd.f32 %v867, %v975
        %v977 = vpop.f32.mrb[0].mxu0
        %v978 = vpop.f32.mrb[0].mxu0
        %979 = vdwg.mxu0
        %980 = vmatprep.subr.bf16.mxu0 %v829
        %981 = vmatpush1.bf16.msra.mxu0 %v828
        %982 = vmatprep.subr.bf16.mxu0 %v837
        %983 = vmatpush1.bf16.msra.mxu0 %v836
        %984 = vmatprep.subr.bf16.mxu0 %v845
        %985 = vmatpush1.bf16.msra.mxu0 %v844
        %986 = vmatprep.subr.bf16.mxu0 %v853
        %987 = vmatpush1.bf16.msra.mxu0 %v852
        %988 = vmatprep.subr.bf16.mxu0 %v890
        %989 = vmatpush1.bf16.msra.mxu0 %v887
        %990 = vmatprep.subr.bf16.mxu0 0
        %991 = vmatpush1.bf16.msra.mxu0 0
        %992 = vmatprep.subr.bf16.mxu0 0
        %993 = vmatpush1.bf16.msra.mxu0 0
        %994 = vmatprep.subr.bf16.mxu0 0
        %995 = vmatpush1.bf16.msra.mxu0 0
        %996 = vmatprep.subr.bf16.mxu0 0
        %997 = vmatpush1.bf16.msra.mxu0 0
        %998 = vmatprep.subr.bf16.mxu0 0
        %999 = vmatpush1.bf16.msra.mxu0 0
        %1000 = vmatprep.subr.bf16.mxu0 0
        %1001 = vmatpush1.bf16.msra.mxu0 0
        %1002 = vmatprep.subr.bf16.mxu0 0
        %1003 = vmatpush1.bf16.msra.mxu0 0
        %1004 = vmatprep.subr.bf16.mxu0 0
        %1005 = vmatpush1.bf16.msra.mxu0 0
        %1006 = vmatprep.subr.bf16.mxu0 0
        %1007 = vmatpush1.bf16.msra.mxu0 0
        %1008 = vmatprep.subr.bf16.mxu0 0
        %1009 = vmatpush1.bf16.msra.mxu0 0
        %1010 = vmatprep.subr.bf16.mxu0 0
        %1011 = vmatpush1.bf16.msra.mxu0 0
        %1012 = vmatprep.mubr.bf16.mxu0 0
        %1013 = vmatmul.mubr.bf16.gmra.mrb[0].mxu0 %v871
        %v1014 = vpop.f32.mrb[0].mxu0
        %v1015 = vadd.f32 %v867, %v1014
        %v1016 = vpop.f32.mrb[0].mxu0
        %v1017 = vadd.f32 %v867, %v1016
        %v1018 = vpop.f32.mrb[0].mxu0
        %v1019 = vpop.f32.mrb[0].mxu0
        %1020 = vdwg.mxu0
        %1021 = vmatprep.subr.bf16.mxu0 %v831
        %1022 = vmatpush1.bf16.msra.mxu0 %v830
        %1023 = vmatprep.subr.bf16.mxu0 %v839
        %1024 = vmatpush1.bf16.msra.mxu0 %v838
        %1025 = vmatprep.subr.bf16.mxu0 %v847
        %1026 = vmatpush1.bf16.msra.mxu0 %v846
        %1027 = vmatprep.subr.bf16.mxu0 %v855
        %1028 = vmatpush1.bf16.msra.mxu0 %v854
        %1029 = vmatprep.subr.bf16.mxu0 %v896
        %1030 = vmatpush1.bf16.msra.mxu0 %v893
        %1031 = vmatprep.subr.bf16.mxu0 0
        %1032 = vmatpush1.bf16.msra.mxu0 0
        %1033 = vmatprep.subr.bf16.mxu0 0
        %1034 = vmatpush1.bf16.msra.mxu0 0
        %1035 = vmatprep.subr.bf16.mxu0 0
        %1036 = vmatpush1.bf16.msra.mxu0 0
        %1037 = vmatprep.subr.bf16.mxu0 0
        %1038 = vmatpush1.bf16.msra.mxu0 0
        %1039 = vmatprep.subr.bf16.mxu0 0
        %1040 = vmatpush1.bf16.msra.mxu0 0
        %1041 = vmatprep.subr.bf16.mxu0 0
        %1042 = vmatpush1.bf16.msra.mxu0 0
        %1043 = vmatprep.subr.bf16.mxu0 0
        %1044 = vmatpush1.bf16.msra.mxu0 0
        %1045 = vmatprep.subr.bf16.mxu0 0
        %1046 = vmatpush1.bf16.msra.mxu0 0
        %1047 = vmatprep.subr.bf16.mxu0 0
        %1048 = vmatpush1.bf16.msra.mxu0 0
        %1049 = vmatprep.subr.bf16.mxu0 0
        %1050 = vmatpush1.bf16.msra.mxu0 0
        %1051 = vmatprep.subr.bf16.mxu0 0
        %1052 = vmatpush1.bf16.msra.mxu0 0
        %1053 = vmatprep.mubr.bf16.mxu0 0
        %1054 = vmatmul.mubr.bf16.gmra.mrb[0].mxu0 %v871
        %v1055 = vpop.f32.mrb[0].mxu0
        %v1056 = vadd.f32 %v867, %v1055
        %v1057 = vpop.f32.mrb[0].mxu0
        %v1058 = vadd.f32 %v867, %v1057
        %v1059 = vpop.f32.mrb[0].mxu0
        %v1060 = vpop.f32.mrb[0].mxu0
        %1061 = vdwg.mxu0
        %v1062 = vmax.f32 %v933, 0.0
        %v1063 = vmax.f32 %v935, 0.0
        %v1064 = vmax.f32 %v974, 0.0
        %v1065 = vmax.f32 %v976, 0.0
        %v1066 = vmax.f32 %v1015, 0.0
        %v1067 = vmax.f32 %v1017, 0.0
        %v1068 = vmax.f32 %v1056, 0.0
        %v1069 = vmax.f32 %v1058, 0.0
        %v1070 = vld [vmem:[%s4] sm:$0xf]
        %v1071 = vld [vmem:[%s5] sm:$0xff]
        %1072 = vrot.lane.b32.xlu0 %v1062, 17
        %v1073 = vpop.permute.xlu0 %1072
        %1074 = vrot.lane.b32.xlu0 %v1063, 17
        %v1075 = vpop.permute.xlu0 %1074
        %1076 = vrot.lane.b32.xlu0 %v1064, 17
        %v1077 = vpop.permute.xlu0 %1076
        %1078 = vrot.lane.b32.xlu0 %v1065, 17
        %v1079 = vpop.permute.xlu0 %1078
        %1080 = vrot.lane.b32.xlu0 %v1066, 17
        %v1081 = vpop.permute.xlu0 %1080
        %1082 = vrot.lane.b32.xlu0 %v1067, 17
        %v1083 = vpop.permute.xlu0 %1082
        %1084 = vrot.lane.b32.xlu0 %v1068, 17
        %v1085 = vpop.permute.xlu0 %1084
        %1086 = vrot.lane.b32.xlu0 %v1069, 17
        %v1087 = vpop.permute.xlu0 %1086
        %v1088 = vsel %vm320, %v1085, %v1087
        %v1089 = vsel %vm320, %v1083, %v1085
        %v1090 = vsel %vm320, %v1081, %v1083
        %v1091 = vsel %vm320, %v1079, %v1081
        %v1092 = vsel %vm320, %v1077, %v1079
        %v1093 = vsel %vm320, %v1075, %v1077
        %v1094 = vsel %vm320, %v1073, %v1075
        %v1095 = vsel %vm320, %v1087, %v1073
        %v1096 = vmul.f32 %v1095, %v332
        %v1097 = vmul.f32 %v1094, %v336
        %v1098 = vmul.f32 %v1093, %v340
        %v1099 = vmul.f32 %v1092, %v344
        %v1100 = vmul.f32 %v1091, %v348
        %v1101 = vmul.f32 %v1090, %v352
        %v1102 = vmul.f32 %v1089, %v356
        %v1103 = vmul.f32 %v1088, %v360
        %1104 = vrot.lane.b32.xlu0 %v1062, 16
        %v1105 = vpop.permute.xlu0 %1104
        %1106 = vrot.lane.b32.xlu0 %v1063, 16
        %v1107 = vpop.permute.xlu0 %1106
        %1108 = vrot.lane.b32.xlu0 %v1064, 16
        %v1109 = vpop.permute.xlu0 %1108
        %1110 = vrot.lane.b32.xlu0 %v1065, 16
        %v1111 = vpop.permute.xlu0 %1110
        %1112 = vrot.lane.b32.xlu0 %v1066, 16
        %v1113 = vpop.permute.xlu0 %1112
        %1114 = vrot.lane.b32.xlu0 %v1067, 16
        %v1115 = vpop.permute.xlu0 %1114
        %1116 = vrot.lane.b32.xlu0 %v1068, 16
        %v1117 = vpop.permute.xlu0 %1116
        %1118 = vrot.lane.b32.xlu0 %v1069, 16
        %v1119 = vpop.permute.xlu0 %1118
        %v1120 = vsel %vm385, %v1117, %v1119
        %v1121 = vsel %vm385, %v1115, %v1117
        %v1122 = vsel %vm385, %v1113, %v1115
        %v1123 = vsel %vm385, %v1111, %v1113
        %v1124 = vsel %vm385, %v1109, %v1111
        %v1125 = vsel %vm385, %v1107, %v1109
        %v1126 = vsel %vm385, %v1105, %v1107
        %v1127 = vsel %vm385, %v1119, %v1105
        %v1128 = vmul.f32 %v1127, %v397
        %v1129 = vmul.f32 %v1126, %v401
        %v1130 = vmul.f32 %v1125, %v405
        %v1131 = vmul.f32 %v1124, %v409
        %v1132 = vmul.f32 %v1123, %v413
        %v1133 = vmul.f32 %v1122, %v417
        %v1134 = vmul.f32 %v1121, %v421
        %v1135 = vmul.f32 %v1120, %v425
        %1136 = vrot.lane.b32.xlu0 %v1062, 15
        %v1137 = vpop.permute.xlu0 %1136
        %1138 = vrot.lane.b32.xlu0 %v1063, 15
        %v1139 = vpop.permute.xlu0 %1138
        %1140 = vrot.lane.b32.xlu0 %v1064, 15
        %v1141 = vpop.permute.xlu0 %1140
        %1142 = vrot.lane.b32.xlu0 %v1065, 15
        %v1143 = vpop.permute.xlu0 %1142
        %1144 = vrot.lane.b32.xlu0 %v1066, 15
        %v1145 = vpop.permute.xlu0 %1144
        %1146 = vrot.lane.b32.xlu0 %v1067, 15
        %v1147 = vpop.permute.xlu0 %1146
        %1148 = vrot.lane.b32.xlu0 %v1068, 15
        %v1149 = vpop.permute.xlu0 %1148
        %1150 = vrot.lane.b32.xlu0 %v1069, 15
        %v1151 = vpop.permute.xlu0 %1150
        %v1152 = vsel %vm450, %v1149, %v1151
        %v1153 = vsel %vm450, %v1147, %v1149
        %v1154 = vsel %vm450, %v1145, %v1147
        %v1155 = vsel %vm450, %v1143, %v1145
        %v1156 = vsel %vm450, %v1141, %v1143
        %v1157 = vsel %vm450, %v1139, %v1141
        %v1158 = vsel %vm450, %v1137, %v1139
        %v1159 = vsel %vm450, %v1151, %v1137
        %v1160 = vmul.f32 %v1159, %v462
        %v1161 = vmul.f32 %v1158, %v466
        %v1162 = vmul.f32 %v1157, %v470
        %v1163 = vmul.f32 %v1156, %v474
        %v1164 = vmul.f32 %v1155, %v478
        %v1165 = vmul.f32 %v1154, %v482
        %v1166 = vmul.f32 %v1153, %v486
        %v1167 = vmul.f32 %v1152, %v490
        %1168 = vrot.lane.b32.xlu0 %v1062, 1
        %v1169 = vpop.permute.xlu0 %1168
        %1170 = vrot.lane.b32.xlu0 %v1063, 1
        %v1171 = vpop.permute.xlu0 %1170
        %1172 = vrot.lane.b32.xlu0 %v1064, 1
        %v1173 = vpop.permute.xlu0 %1172
        %1174 = vrot.lane.b32.xlu0 %v1065, 1
        %v1175 = vpop.permute.xlu0 %1174
        %1176 = vrot.lane.b32.xlu0 %v1066, 1
        %v1177 = vpop.permute.xlu0 %1176
        %1178 = vrot.lane.b32.xlu0 %v1067, 1
        %v1179 = vpop.permute.xlu0 %1178
        %1180 = vrot.lane.b32.xlu0 %v1068, 1
        %v1181 = vpop.permute.xlu0 %1180
        %1182 = vrot.lane.b32.xlu0 %v1069, 1
        %v1183 = vpop.permute.xlu0 %1182
        %v1184 = vsel %vm515, %v1181, %v1183
        %v1185 = vsel %vm515, %v1179, %v1181
        %v1186 = vsel %vm515, %v1177, %v1179
        %v1187 = vsel %vm515, %v1175, %v1177
        %v1188 = vsel %vm515, %v1173, %v1175
        %v1189 = vsel %vm515, %v1171, %v1173
        %v1190 = vsel %vm515, %v1169, %v1171
        %v1191 = vsel %vm515, %v1183, %v1169
        %v1192 = vmul.f32 %v1191, %v527
        %v1193 = vmul.f32 %v1190, %v531
        %v1194 = vmul.f32 %v1189, %v535
        %v1195 = vmul.f32 %v1188, %v539
        %v1196 = vmul.f32 %v1187, %v543
        %v1197 = vmul.f32 %v1186, %v547
        %v1198 = vmul.f32 %v1185, %v551
        %v1199 = vmul.f32 %v1184, %v555
        %1200 = vrot.lane.b32.xlu0 %v1062, 127
        %v1201 = vpop.permute.xlu0 %1200
        %1202 = vrot.lane.b32.xlu0 %v1063, 127
        %v1203 = vpop.permute.xlu0 %1202
        %1204 = vrot.lane.b32.xlu0 %v1064, 127
        %v1205 = vpop.permute.xlu0 %1204
        %1206 = vrot.lane.b32.xlu0 %v1065, 127
        %v1207 = vpop.permute.xlu0 %1206
        %1208 = vrot.lane.b32.xlu0 %v1066, 127
        %v1209 = vpop.permute.xlu0 %1208
        %1210 = vrot.lane.b32.xlu0 %v1067, 127
        %v1211 = vpop.permute.xlu0 %1210
        %1212 = vrot.lane.b32.xlu0 %v1068, 127
        %v1213 = vpop.permute.xlu0 %1212
        %1214 = vrot.lane.b32.xlu0 %v1069, 127
        %v1215 = vpop.permute.xlu0 %1214
        %v1216 = vsel %vm580, %v1213, %v1215
        %v1217 = vsel %vm580, %v1211, %v1213
        %v1218 = vsel %vm580, %v1209, %v1211
        %v1219 = vsel %vm580, %v1207, %v1209
        %v1220 = vsel %vm580, %v1205, %v1207
        %v1221 = vsel %vm580, %v1203, %v1205
        %v1222 = vsel %vm580, %v1201, %v1203
        %v1223 = vsel %vm580, %v1215, %v1201
        %v1224 = vmul.f32 %v1222, %v592
        %v1225 = vmul.f32 %v1221, %v596
        %v1226 = vmul.f32 %v1220, %v600
        %v1227 = vmul.f32 %v1219, %v604
        %v1228 = vmul.f32 %v1218, %v608
        %v1229 = vmul.f32 %v1217, %v612
        %v1230 = vmul.f32 %v1216, %v616
        %v1231 = vmul.f32 %v1223, %v620
        %1232 = vrot.lane.b32.xlu0 %v1062, 113
        %v1233 = vpop.permute.xlu0 %1232
        %1234 = vrot.lane.b32.xlu0 %v1063, 113
        %v1235 = vpop.permute.xlu0 %1234
        %1236 = vrot.lane.b32.xlu0 %v1064, 113
        %v1237 = vpop.permute.xlu0 %1236
        %1238 = vrot.lane.b32.xlu0 %v1065, 113
        %v1239 = vpop.permute.xlu0 %1238
        %1240 = vrot.lane.b32.xlu0 %v1066, 113
        %v1241 = vpop.permute.xlu0 %1240
        %1242 = vrot.lane.b32.xlu0 %v1067, 113
        %v1243 = vpop.permute.xlu0 %1242
        %1244 = vrot.lane.b32.xlu0 %v1068, 113
        %v1245 = vpop.permute.xlu0 %1244
        %1246 = vrot.lane.b32.xlu0 %v1069, 113
        %v1247 = vpop.permute.xlu0 %1246
        %v1248 = vsel %vm645, %v1245, %v1247
        %v1249 = vsel %vm645, %v1243, %v1245
        %v1250 = vsel %vm645, %v1241, %v1243
        %v1251 = vsel %vm645, %v1239, %v1241
        %v1252 = vsel %vm645, %v1237, %v1239
        %v1253 = vsel %vm645, %v1235, %v1237
        %v1254 = vsel %vm645, %v1233, %v1235
        %v1255 = vsel %vm645, %v1247, %v1233
        %v1256 = vmul.f32 %v1254, %v657
        %v1257 = vmul.f32 %v1253, %v661
        %v1258 = vmul.f32 %v1252, %v665
        %v1259 = vmul.f32 %v1251, %v669
        %v1260 = vmul.f32 %v1250, %v673
        %v1261 = vmul.f32 %v1249, %v677
        %v1262 = vmul.f32 %v1248, %v681
        %v1263 = vmul.f32 %v1255, %v685
        %1264 = vrot.lane.b32.xlu0 %v1062, 112
        %v1265 = vpop.permute.xlu0 %1264
        %1266 = vrot.lane.b32.xlu0 %v1063, 112
        %v1267 = vpop.permute.xlu0 %1266
        %1268 = vrot.lane.b32.xlu0 %v1064, 112
        %v1269 = vpop.permute.xlu0 %1268
        %1270 = vrot.lane.b32.xlu0 %v1065, 112
        %v1271 = vpop.permute.xlu0 %1270
        %1272 = vrot.lane.b32.xlu0 %v1066, 112
        %v1273 = vpop.permute.xlu0 %1272
        %1274 = vrot.lane.b32.xlu0 %v1067, 112
        %v1275 = vpop.permute.xlu0 %1274
        %1276 = vrot.lane.b32.xlu0 %v1068, 112
        %v1277 = vpop.permute.xlu0 %1276
        %1278 = vrot.lane.b32.xlu0 %v1069, 112
        %v1279 = vpop.permute.xlu0 %1278
        %v1280 = vsel %vm710, %v1277, %v1279
        %v1281 = vsel %vm710, %v1275, %v1277
        %v1282 = vsel %vm710, %v1273, %v1275
        %v1283 = vsel %vm710, %v1271, %v1273
        %v1284 = vsel %vm710, %v1269, %v1271
        %v1285 = vsel %vm710, %v1267, %v1269
        %v1286 = vsel %vm710, %v1265, %v1267
        %v1287 = vsel %vm710, %v1279, %v1265
        %v1288 = vmul.f32 %v1286, %v722
        %v1289 = vmul.f32 %v1285, %v726
        %v1290 = vmul.f32 %v1284, %v730
        %v1291 = vmul.f32 %v1283, %v734
        %v1292 = vmul.f32 %v1282, %v738
        %v1293 = vmul.f32 %v1281, %v742
        %v1294 = vmul.f32 %v1280, %v746
        %v1295 = vmul.f32 %v1287, %v750
        %1296 = vrot.lane.b32.xlu0 %v1062, 111
        %v1297 = vpop.permute.xlu0 %1296
        %1298 = vrot.lane.b32.xlu0 %v1063, 111
        %v1299 = vpop.permute.xlu0 %1298
        %1300 = vrot.lane.b32.xlu0 %v1064, 111
        %v1301 = vpop.permute.xlu0 %1300
        %1302 = vrot.lane.b32.xlu0 %v1065, 111
        %v1303 = vpop.permute.xlu0 %1302
        %1304 = vrot.lane.b32.xlu0 %v1066, 111
        %v1305 = vpop.permute.xlu0 %1304
        %1306 = vrot.lane.b32.xlu0 %v1067, 111
        %v1307 = vpop.permute.xlu0 %1306
        %1308 = vrot.lane.b32.xlu0 %v1068, 111
        %v1309 = vpop.permute.xlu0 %1308
        %1310 = vrot.lane.b32.xlu0 %v1069, 111
        %v1311 = vpop.permute.xlu0 %1310
        %v1312 = vsel %vm775, %v1309, %v1311
        %v1313 = vsel %vm775, %v1307, %v1309
        %v1314 = vsel %vm775, %v1305, %v1307
        %v1315 = vsel %vm775, %v1303, %v1305
        %v1316 = vsel %vm775, %v1301, %v1303
        %v1317 = vsel %vm775, %v1299, %v1301
        %v1318 = vsel %vm775, %v1297, %v1299
        %v1319 = vsel %vm775, %v1311, %v1297
        %v1320 = vmul.f32 %v1318, %v787
        %v1321 = vmul.f32 %v1317, %v791
        %v1322 = vmul.f32 %v1316, %v795
        %v1323 = vmul.f32 %v1315, %v799
        %v1324 = vmul.f32 %v1314, %v803
        %v1325 = vmul.f32 %v1313, %v807
        %v1326 = vmul.f32 %v1312, %v811
        %v1327 = vmul.f32 %v1319, %v815
        %v1328 = vpack.c.bf16 %v1128, %v1096
        %v1329 = vpack.c.bf16 %v1129, %v1097
        %v1330 = vpack.c.bf16 %v1130, %v1098
        %v1331 = vpack.c.bf16 %v1131, %v1099
        %v1332 = vpack.c.bf16 %v1132, %v1100
        %v1333 = vpack.c.bf16 %v1133, %v1101
        %v1334 = vpack.c.bf16 %v1134, %v1102
        %v1335 = vpack.c.bf16 %v1135, %v1103
        %v1336 = vpack.c.bf16 %v1192, %v1160
        %v1337 = vpack.c.bf16 %v1193, %v1161
        %v1338 = vpack.c.bf16 %v1194, %v1162
        %v1339 = vpack.c.bf16 %v1195, %v1163
        %v1340 = vpack.c.bf16 %v1196, %v1164
        %v1341 = vpack.c.bf16 %v1197, %v1165
        %v1342 = vpack.c.bf16 %v1198, %v1166
        %v1343 = vpack.c.bf16 %v1199, %v1167
        %v1344 = vpack.c.bf16 %v1224, %v1062
        %v1345 = vpack.c.bf16 %v1225, %v1063
        %v1346 = vpack.c.bf16 %v1226, %v1064
        %v1347 = vpack.c.bf16 %v1227, %v1065
        %v1348 = vpack.c.bf16 %v1228, %v1066
        %v1349 = vpack.c.bf16 %v1229, %v1067
        %v1350 = vpack.c.bf16 %v1230, %v1068
        %v1351 = vpack.c.bf16 %v1231, %v1069
        %v1352 = vpack.c.bf16 %v1288, %v1256
        %v1353 = vpack.c.bf16 %v1289, %v1257
        %v1354 = vpack.c.bf16 %v1290, %v1258
        %v1355 = vpack.c.bf16 %v1291, %v1259
        %v1356 = vpack.c.bf16 %v1292, %v1260
        %v1357 = vpack.c.bf16 %v1293, %v1261
        %v1358 = vpack.c.bf16 %v1294, %v1262
        %v1359 = vpack.c.bf16 %v1295, %v1263
        %v1360 = vpack.c.bf16 %v1320, %v1320
        %v1361 = vpack.c.bf16 %v1321, %v1321
        %v1362 = vpack.c.bf16 %v1322, %v1322
        %v1363 = vpack.c.bf16 %v1323, %v1323
        %v1364 = vpack.c.bf16 %v1324, %v1324
        %v1365 = vpack.c.bf16 %v1325, %v1325
        %v1366 = vpack.c.bf16 %v1326, %v1326
        %v1367 = vpack.c.bf16 %v1327, %v1327
        %1369 = vset.pattern.permute.xlu0 0
        %1370 = vperm.xlu0 %1369, %v1071
        %v1371 = vpop.permute.xlu0 %1370
        %v1374 = vsel %vm869, %v1070, 0
        %v1377 = vsel %vm873, %v1360, 0
        %v1380 = vsel %vm873, %v1361, 0
        %v1383 = vsel %vm873, %v1362, 0
        %v1386 = vsel %vm873, %v1363, 0
        %v1389 = vsel %vm873, %v1364, 0
        %v1392 = vsel %vm873, %v1365, 0
        %v1395 = vsel %vm873, %v1366, 0
        %v1398 = vsel %vm873, %v1367, 0
        %1400 = vmatprep.subr.bf16.mxu0 %v1329
        %1401 = vmatpush1.bf16.msra.mxu0 %v1328
        %1402 = vmatprep.subr.bf16.mxu0 %v1337
        %1403 = vmatpush1.bf16.msra.mxu0 %v1336
        %1404 = vmatprep.subr.bf16.mxu0 %v1345
        %1405 = vmatpush1.bf16.msra.mxu0 %v1344
        %1406 = vmatprep.subr.bf16.mxu0 %v1353
        %1407 = vmatpush1.bf16.msra.mxu0 %v1352
        %1408 = vmatprep.subr.bf16.mxu0 %v1380
        %1409 = vmatpush1.bf16.msra.mxu0 %v1377
        %1410 = vmatprep.subr.bf16.mxu0 0
        %1411 = vmatpush1.bf16.msra.mxu0 0
        %1412 = vmatprep.subr.bf16.mxu0 0
        %1413 = vmatpush1.bf16.msra.mxu0 0
        %1414 = vmatprep.subr.bf16.mxu0 0
        %1415 = vmatpush1.bf16.msra.mxu0 0
        %1416 = vmatprep.subr.bf16.mxu0 0
        %1417 = vmatpush1.bf16.msra.mxu0 0
        %1418 = vmatprep.subr.bf16.mxu0 0
        %1419 = vmatpush1.bf16.msra.mxu0 0
        %1420 = vmatprep.subr.bf16.mxu0 0
        %1421 = vmatpush1.bf16.msra.mxu0 0
        %1422 = vmatprep.subr.bf16.mxu0 0
        %1423 = vmatpush1.bf16.msra.mxu0 0
        %1424 = vmatprep.subr.bf16.mxu0 0
        %1425 = vmatpush1.bf16.msra.mxu0 0
        %1426 = vmatprep.subr.bf16.mxu0 0
        %1427 = vmatpush1.bf16.msra.mxu0 0
        %1428 = vmatprep.subr.bf16.mxu0 0
        %1429 = vmatpush1.bf16.msra.mxu0 0
        %1430 = vmatprep.subr.bf16.mxu0 0
        %1431 = vmatpush1.bf16.msra.mxu0 0
        %1432 = vmatprep.mubr.bf16.mxu0 0
        %1433 = vmatmul.mubr.bf16.gmra.mrb[0].mxu0 %v1374
        %v1434 = vpop.f32.mrb[0].mxu0
        %v1435 = vadd.f32 %v1371, %v1434
        %v1436 = vpop.f32.mrb[0].mxu0
        %v1437 = vadd.f32 %v1371, %v1436
        %v1438 = vpop.f32.mrb[0].mxu0
        %v1439 = vpop.f32.mrb[0].mxu0
        %1440 = vdwg.mxu0
        %1441 = vmatprep.subr.bf16.mxu0 %v1331
        %1442 = vmatpush1.bf16.msra.mxu0 %v1330
        %1443 = vmatprep.subr.bf16.mxu0 %v1339
        %1444 = vmatpush1.bf16.msra.mxu0 %v1338
        %1445 = vmatprep.subr.bf16.mxu0 %v1347
        %1446 = vmatpush1.bf16.msra.mxu0 %v1346
        %1447 = vmatprep.subr.bf16.mxu0 %v1355
        %1448 = vmatpush1.bf16.msra.mxu0 %v1354
        %1449 = vmatprep.subr.bf16.mxu0 %v1386
        %1450 = vmatpush1.bf16.msra.mxu0 %v1383
        %1451 = vmatprep.subr.bf16.mxu0 0
        %1452 = vmatpush1.bf16.msra.mxu0 0
        %1453 = vmatprep.subr.bf16.mxu0 0
        %1454 = vmatpush1.bf16.msra.mxu0 0
        %1455 = vmatprep.subr.bf16.mxu0 0
        %1456 = vmatpush1.bf16.msra.mxu0 0
        %1457 = vmatprep.subr.bf16.mxu0 0
        %1458 = vmatpush1.bf16.msra.mxu0 0
        %1459 = vmatprep.subr.bf16.mxu0 0
        %1460 = vmatpush1.bf16.msra.mxu0 0
        %1461 = vmatprep.subr.bf16.mxu0 0
        %1462 = vmatpush1.bf16.msra.mxu0 0
        %1463 = vmatprep.subr.bf16.mxu0 0
        %1464 = vmatpush1.bf16.msra.mxu0 0
        %1465 = vmatprep.subr.bf16.mxu0 0
        %1466 = vmatpush1.bf16.msra.mxu0 0
        %1467 = vmatprep.subr.bf16.mxu0 0
        %1468 = vmatpush1.bf16.msra.mxu0 0
        %1469 = vmatprep.subr.bf16.mxu0 0
        %1470 = vmatpush1.bf16.msra.mxu0 0
        %1471 = vmatprep.subr.bf16.mxu0 0
        %1472 = vmatpush1.bf16.msra.mxu0 0
        %1473 = vmatprep.mubr.bf16.mxu0 0
        %1474 = vmatmul.mubr.bf16.gmra.mrb[0].mxu0 %v1374
        %v1475 = vpop.f32.mrb[0].mxu0
        %v1476 = vadd.f32 %v1371, %v1475
        %v1477 = vpop.f32.mrb[0].mxu0
        %v1478 = vadd.f32 %v1371, %v1477
        %v1479 = vpop.f32.mrb[0].mxu0
        %v1480 = vpop.f32.mrb[0].mxu0
        %1481 = vdwg.mxu0
        %1482 = vmatprep.subr.bf16.mxu0 %v1333
        %1483 = vmatpush1.bf16.msra.mxu0 %v1332
        %1484 = vmatprep.subr.bf16.mxu0 %v1341
        %1485 = vmatpush1.bf16.msra.mxu0 %v1340
        %1486 = vmatprep.subr.bf16.mxu0 %v1349
        %1487 = vmatpush1.bf16.msra.mxu0 %v1348
        %1488 = vmatprep.subr.bf16.mxu0 %v1357
        %1489 = vmatpush1.bf16.msra.mxu0 %v1356
        %1490 = vmatprep.subr.bf16.mxu0 %v1392
        %1491 = vmatpush1.bf16.msra.mxu0 %v1389
        %1492 = vmatprep.subr.bf16.mxu0 0
        %1493 = vmatpush1.bf16.msra.mxu0 0
        %1494 = vmatprep.subr.bf16.mxu0 0
        %1495 = vmatpush1.bf16.msra.mxu0 0
        %1496 = vmatprep.subr.bf16.mxu0 0
        %1497 = vmatpush1.bf16.msra.mxu0 0
        %1498 = vmatprep.subr.bf16.mxu0 0
        %1499 = vmatpush1.bf16.msra.mxu0 0
        %1500 = vmatprep.subr.bf16.mxu0 0
        %1501 = vmatpush1.bf16.msra.mxu0 0
        %1502 = vmatprep.subr.bf16.mxu0 0
        %1503 = vmatpush1.bf16.msra.mxu0 0
        %1504 = vmatprep.subr.bf16.mxu0 0
        %1505 = vmatpush1.bf16.msra.mxu0 0
        %1506 = vmatprep.subr.bf16.mxu0 0
        %1507 = vmatpush1.bf16.msra.mxu0 0
        %1508 = vmatprep.subr.bf16.mxu0 0
        %1509 = vmatpush1.bf16.msra.mxu0 0
        %1510 = vmatprep.subr.bf16.mxu0 0
        %1511 = vmatpush1.bf16.msra.mxu0 0
        %1512 = vmatprep.subr.bf16.mxu0 0
        %1513 = vmatpush1.bf16.msra.mxu0 0
        %1514 = vmatprep.mubr.bf16.mxu0 0
        %1515 = vmatmul.mubr.bf16.gmra.mrb[0].mxu0 %v1374
        %v1516 = vpop.f32.mrb[0].mxu0
        %v1517 = vadd.f32 %v1371, %v1516
        %v1518 = vpop.f32.mrb[0].mxu0
        %v1519 = vadd.f32 %v1371, %v1518
        %v1520 = vpop.f32.mrb[0].mxu0
        %v1521 = vpop.f32.mrb[0].mxu0
        %1522 = vdwg.mxu0
        %1523 = vmatprep.subr.bf16.mxu0 %v1335
        %1524 = vmatpush1.bf16.msra.mxu0 %v1334
        %1525 = vmatprep.subr.bf16.mxu0 %v1343
        %1526 = vmatpush1.bf16.msra.mxu0 %v1342
        %1527 = vmatprep.subr.bf16.mxu0 %v1351
        %1528 = vmatpush1.bf16.msra.mxu0 %v1350
        %1529 = vmatprep.subr.bf16.mxu0 %v1359
        %1530 = vmatpush1.bf16.msra.mxu0 %v1358
        %1531 = vmatprep.subr.bf16.mxu0 %v1398
        %1532 = vmatpush1.bf16.msra.mxu0 %v1395
        %1533 = vmatprep.subr.bf16.mxu0 0
        %1534 = vmatpush1.bf16.msra.mxu0 0
        %1535 = vmatprep.subr.bf16.mxu0 0
        %1536 = vmatpush1.bf16.msra.mxu0 0
        %1537 = vmatprep.subr.bf16.mxu0 0
        %1538 = vmatpush1.bf16.msra.mxu0 0
        %1539 = vmatprep.subr.bf16.mxu0 0
        %1540 = vmatpush1.bf16.msra.mxu0 0
        %1541 = vmatprep.subr.bf16.mxu0 0
        %1542 = vmatpush1.bf16.msra.mxu0 0
        %1543 = vmatprep.subr.bf16.mxu0 0
        %1544 = vmatpush1.bf16.msra.mxu0 0
        %1545 = vmatprep.subr.bf16.mxu0 0
        %1546 = vmatpush1.bf16.msra.mxu0 0
        %1547 = vmatprep.subr.bf16.mxu0 0
        %1548 = vmatpush1.bf16.msra.mxu0 0
        %1549 = vmatprep.subr.bf16.mxu0 0
        %1550 = vmatpush1.bf16.msra.mxu0 0
        %1551 = vmatprep.subr.bf16.mxu0 0
        %1552 = vmatpush1.bf16.msra.mxu0 0
        %1553 = vmatprep.subr.bf16.mxu0 0
        %1554 = vmatpush1.bf16.msra.mxu0 0
        %1555 = vmatprep.mubr.bf16.mxu0 0
        %1556 = vmatmul.mubr.bf16.gmra.mrb[0].mxu0 %v1374
        %v1557 = vpop.f32.mrb[0].mxu0
        %v1558 = vadd.f32 %v1371, %v1557
        %v1559 = vpop.f32.mrb[0].mxu0
        %v1560 = vadd.f32 %v1371, %v1559
        %v1561 = vpop.f32.mrb[0].mxu0
        %v1562 = vpop.f32.mrb[0].mxu0
        %1563 = vdwg.mxu0
        %v1564 = vmax.f32 %v1435, 0.0
        %v1565 = vmax.f32 %v1437, 0.0
        %v1566 = vmax.f32 %v1476, 0.0
        %v1567 = vmax.f32 %v1478, 0.0
        %v1568 = vmax.f32 %v1517, 0.0
        %v1569 = vmax.f32 %v1519, 0.0
        %v1570 = vmax.f32 %v1558, 0.0
        %v1571 = vmax.f32 %v1560, 0.0
        %1572 = vst [vmem:[%s280] sm:$0xff] %v1564
        %1573 = vst [vmem:[%s280 + $0x8] sm:$0xff] %v1565
        %1574 = vst [vmem:[%s280 + $0x10] sm:$0xff] %v1566
        %1575 = vst [vmem:[%s280 + $0x18] sm:$0xff] %v1567
        %1576 = vst [vmem:[%s280 + $0x20] sm:$0xff] %v1568
        %1577 = vst [vmem:[%s280 + $0x28] sm:$0xff] %v1569
        %1578 = vst [vmem:[%s280 + $0x30] sm:$0xff] %v1570
        %1579 = vst [vmem:[%s280 + $0x38] sm:$0xff] %v1571
        %s1580 = sand.u32 %s163, 1
        %s1581 = scalar_lea.sflag [#allocation4], %s1580
        %s1582 = sand.u32 %s163, 1
        %s1583 = smul.addr %s1582, 64
        %s1584 = scalar_lea.vmem [#allocation7], %s1583
        // Predicated region
        $region53: #{tpu_custom_call.1} parent=43 // pred_check
          %p1585 = pneg %p173
        $region54: #{tpu_custom_call.1} parent=43 // pred_check_branch
          %1587 = sbr.rel (%p1585) target = $region56
        $region55: #{tpu_custom_call.1} parent=43 // pred_region
          %s1588 = smul.u32 8, %s24
          %s1590 = ssub.s32 1024, 1024
          %1591 = vsyncadd %s1581, %s1590
          %s1592 = smul.addr %s1588, 128
          %s1593 = scalar_lea.hbm %s6, %s1592
          %s1595 = sshll.u32 %s1584, 4
          %s1596 = int_to_ptr.vmem [resolvable:$true] %s1595
          %1598 = dma.vmem_to_hbm [thread:$0]  %s1596, 1024, %s1593, %s1581
        $region56: #{tpu_custom_call.1} parent=43 // pred_fallthru
          _
      $region44: #{tpu_custom_call.1} parent=5 // pred_fallthru
        _
      %p1599 = scmp.le.s32.totalorder 2, %s19
      // Predicated region
      $region57: #{tpu_custom_call.1} parent=5 // pred_check
        %p1600 = pneg %p1599
      $region58: #{tpu_custom_call.1} parent=5 // pred_check_branch
        %1602 = sbr.rel (%p1600) target = $region60
      $region59: #{tpu_custom_call.1} parent=5 // pred_region
        %s1603 = ssub.s32 %s19, 2
        // Predicated region
        $region61: #{tpu_custom_call.1} parent=59 // pred_check
          %p1604 = pneg %p179
        $region62: #{tpu_custom_call.1} parent=59 // pred_check_branch
          %1606 = sbr.rel (%p1604) target = $region64
        $region63: #{tpu_custom_call.1} parent=59 // pred_region
          %s1607 = sand.u32 %s164, 1
          %s1608 = scalar_lea.sflag [#allocation4], %s1607
          %s1609 = sand.u32 %s164, 1
          %s1610 = smul.addr %s1609, 64
          %s1611 = scalar_lea.vmem [#allocation7], %s1610
          %1612 = dma.done %s1608, 1024
        $region64: #{tpu_custom_call.1} parent=59 // pred_fallthru
          _
      $region60: #{tpu_custom_call.1} parent=5 // pred_fallthru
        _
    $region6: #{tpu_custom_call.1} parent=1 // loop_footer
      %s23 = sadd.s32 1, %s19
    $region7: #{tpu_custom_call.1} parent=1 // loop_footer_branch
      %18 = sbr.rel target = $region3
    $region8: #{tpu_custom_call.1} parent=1 // loop_exit
      _
    %1613 = vsyncpa [#allocation3], 1
    %s1614 = scalar_lea.sflag [#allocation3], 1
    %1615 = vsyncpa %s1614, 1
    %1616 = vsyncpa [#allocation6], 1
    %1617 = vsyncpa [#allocation4], 1
    %s1618 = scalar_lea.sflag [#allocation4], 1
    %1619 = vsyncpa %s1618, 1

</llo_original>
